<compile_context>
chip_gen: v5e
topology: v5e:2x2
jax: 0.10.0
libtpu: 0.0.40
codegen_flags: <defaults>
</compile_context>

<pallas_src>
import jax
import jax.numpy as jnp
from jax import lax
from jax.experimental import pallas as pl
from jax.experimental.pallas import tpu as pltpu

NEG_BIG = -9000000000000000.0
LEAKY_SLOPE = 0.01      # torch.nn.LeakyReLU default
LN_EPS = 1e-5           # torch.nn.LayerNorm default


def _graph_atten_kernel(x_ref, w2_ref, w1_ref, adj_ref, gamma_ref, beta_ref,
                        o_ref):
    # Blocks (batch on the lane axis):
    #   x_ref          : [D, N, Bt]  feature-major, batch-last input
    #   w2_ref         : [D, 1, 1]   mean over heads of slf_att2 conv weight
    #   w1_ref         : [D, 1, 1]   mean over heads of slf_att1 conv weight
    #   adj/gamma/beta : [N, N, 1]   grid-invariant, lane-broadcast over batch
    #   o_ref          : [N, N, Bt]
    N = o_ref.shape[0]
    x = x_ref[...]                                          # [D, N, Bt]

    # Tiny D=8 projections on the VPU: reduce over the *leading* axis — a
    # chain of vreg multiply-adds, no XLU, no MXU.  g2 is indexed by the
    # attention row i, g1 by the column j.
    g2 = jnp.sum(x * w2_ref[...], axis=0)                   # [N, Bt] (row i)
    g1 = jnp.sum(x * w1_ref[...], axis=0)                   # [N, Bt] (col j)

    pre = g2[:, None, :] + g1[None, :, :]                   # [N(i), N(j), Bt]
    e = jnp.maximum(pre, LEAKY_SLOPE * pre)                 # LeakyReLU (slope<1)

    mask = adj_ref[...] > 0                                 # [N, N, 1]

    # Fused mask + softmax over the row axis i (torch dim=1) == axis 0 here:
    # leading-axis max/sum are plain VPU ops, no cross-lane reduce.
    m = jnp.max(jnp.where(mask, e, NEG_BIG), axis=0, keepdims=True)   # [1,N,Bt]
    p = jnp.where(mask, jnp.exp(e - m), 0.0)                          # masked exp
    den = jnp.sum(p, axis=0, keepdims=True)                           # [1,N,Bt]

    den_safe = jnp.where(den > 0.0, den, 1.0)               # no inf/NaN on dead cols
    inv = pl.reciprocal(den_safe, approx=True)              # EUP slot
    inv = inv * (2.0 - den_safe * inv)                      # one Newton step
    # fully-masked column -> torch's -9e15 fill yields a uniform 1/N softmax
    att = jnp.where(den > 0.0, p * inv, 1.0 / N)            # [N, N, Bt]

    # (dropout == identity in eval mode)

    # LayerNorm([N, N]) per batch lane: reduce i (leading-axis VPU adds) then j
    # (one tiny sublane reduce on a [1,N,Bt] tile), keep the lane axis.
    y = att + adj_ref[...]                                  # [N, N, Bt]
    s1 = jnp.sum(jnp.sum(y, axis=0, keepdims=True), axis=1, keepdims=True)
    s2 = jnp.sum(jnp.sum(y * y, axis=0, keepdims=True), axis=1, keepdims=True)
    inv_nn = 1.0 / (N * N)
    mu = s1 * inv_nn                                        # [1, 1, Bt]
    var = s2 * inv_nn - mu * mu
    y_hat = (y - mu) * lax.rsqrt(var + LN_EPS)
    o_ref[...] = (gamma_ref[...] * y_hat + beta_ref[...]).astype(o_ref.dtype)


def _pick_block_b(B):
    # Batch is the lane axis, so prefer tiles that are multiples of 128 lanes.
    # A grid of >= 2 steps (only for B >= 256) keeps both v7x TensorCores busy;
    # on single-core v5e/v6e the extra steps cost only ~0.35us each.  For
    # smaller B a single whole-batch step avoids pointless pipeline overhead.
    # The cap at 1024 lanes keeps a double-buffered step ~10 MiB of VMEM, well
    # under the 32 MiB scoped default on all three generations.
    for bt in (1024, 512, 256, 128):
        if B % bt == 0 and B // bt >= 2:
            return bt
    return B


def graph_atten(x, w1, w2, adj, gamma, beta, *, block_b=None):
    B, N, D = x.shape
    H = w1.shape[1]
    assert w1.shape == (D, H) and w2.shape == (D, H)
    assert adj.shape == (N, N) and gamma.shape == (N, N) and beta.shape == (N, N)

    bt = block_b if block_b is not None else _pick_block_b(B)
    assert B % bt == 0

    # Parameter-only preprocessing: hoist the head mean into the 1x1-conv
    # weights (mean_h(x @ W) == x @ mean_h(W)), shaped for leading-axis
    # broadcast inside the kernel.
    w1m = jnp.mean(w1.astype(jnp.float32), axis=1).reshape(D, 1, 1)
    w2m = jnp.mean(w2.astype(jnp.float32), axis=1).reshape(D, 1, 1)

    # Layout plumbing: batch on the lane (last) axis so every vreg / VMEM tile
    # is lane-dense and every store is an unmasked vst.  One small transpose of
    # x here replaces the previous duplicated feature-major HBM copy.
    xt = jnp.transpose(x.astype(jnp.float32), (2, 1, 0))    # [D, N, B]
    adj3 = adj.astype(jnp.float32).reshape(N, N, 1)
    gamma3 = gamma.astype(jnp.float32).reshape(N, N, 1)
    beta3 = beta.astype(jnp.float32).reshape(N, N, 1)

    grid = (B // bt,)
    out_nnb = pl.pallas_call(
        _graph_atten_kernel,
        out_shape=jax.ShapeDtypeStruct((N, N, B), jnp.float32),
        grid=grid,
        in_specs=[
            pl.BlockSpec((D, N, bt), lambda b: (0, 0, b)),   # x (feature-major, batch-last)
            pl.BlockSpec((D, 1, 1), lambda b: (0, 0, 0)),    # mean_h(W2)
            pl.BlockSpec((D, 1, 1), lambda b: (0, 0, 0)),    # mean_h(W1)
            pl.BlockSpec((N, N, 1), lambda b: (0, 0, 0)),    # adj (grid-invariant)
            pl.BlockSpec((N, N, 1), lambda b: (0, 0, 0)),    # LN gamma
            pl.BlockSpec((N, N, 1), lambda b: (0, 0, 0)),    # LN beta
        ],
        out_specs=pl.BlockSpec((N, N, bt), lambda b: (0, 0, b)),
        compiler_params=pltpu.CompilerParams(
            dimension_semantics=("parallel",),
            vmem_limit_bytes=32 * 1024 * 1024),
    )(xt, w2m, w1m, adj3, gamma3, beta3)

    # Restore the module's [B, N, N] output contract.  Consumers that can take
    # batch-last directly should skip this transpose.
    return jnp.transpose(out_nnb, (2, 0, 1))


def graph_atten_ref(x, w1, w2, adj, gamma, beta):
    """Pure-JAX reference mirroring the PyTorch forward (eval mode)."""
    hp = lax.Precision.HIGHEST  # keep the reference in true f32
    f1 = jnp.einsum("bnd,dh->bhn", x, w1, precision=hp)   # conv1d out [B, H, N]
    f2 = jnp.einsum("bnd,dh->bhn", x, w2, precision=hp)
    s = f1[:, :, None, :] + f2[:, :, :, None]             # [B, H, N, N]
    e = jnp.mean(s, axis=1)
    e = jnp.where(e > 0, e, LEAKY_SLOPE * e)              # LeakyReLU
    logits = jnp.where(adj[None] > 0, e, NEG_BIG)
    att = jax.nn.softmax(logits, axis=1)                  # softmax over dim=1
    y = att + adj[None]
    mu = jnp.mean(y, axis=(1, 2), keepdims=True)
    var = jnp.mean((y - mu) ** 2, axis=(1, 2), keepdims=True)
    return gamma[None] * (y - mu) / jnp.sqrt(var + LN_EPS) + beta[None]


if __name__ == "__main__":
    # batch, nodes, d_in, n_head — batch chosen as one full 128-lane tile so
    # the demo exercises the lane-dense path; still tiny (x = 64 KiB).
    B, N, D, H = 128, 16, 8, 4

    key = jax.random.PRNGKey(0)
    kx, kw1, kw2, kadj, kg = jax.random.split(key, 5)

    x = jax.random.normal(kx, (B, N, D), dtype=jnp.float32)
    # Conv1d weights [H, D, 1] stored transposed as [D, H]
    w1 = jax.random.normal(kw1, (D, H), dtype=jnp.float32) * 0.2
    w2 = jax.random.normal(kw2, (D, H), dtype=jnp.float32) * 0.2
    # adjacency: binary, roughly half connected, self-loops on
    adj = (jax.random.uniform(kadj, (N, N)) > 0.5).astype(jnp.float32)
    adj = jnp.maximum(adj, jnp.eye(N, dtype=jnp.float32))
    # LayerNorm([nodes, nodes]) params (perturbed so the affine part is exercised)
    gamma = jnp.ones((N, N), jnp.float32) + 0.1 * jax.random.normal(kg, (N, N))
    beta = jnp.zeros((N, N), jnp.float32)

    out = graph_atten(x, w1, w2, adj, gamma, beta)
    out = jax.block_until_ready(out)

    ref = graph_atten_ref(x, w1, w2, adj, gamma, beta)
    assert out.shape == (B, N, N)
    err = float(jnp.max(jnp.abs(out - ref)))
    # 2e-4: headroom for the approx-reciprocal (+Newton) softmax and the
    # single-pass E[x^2]-E[x]^2 LayerNorm variance.
    assert jnp.allclose(out, ref, atol=2e-4, rtol=2e-4), err

    print("KERNEL_OK")
</pallas_src>

<mosaic_0001>
module attributes {stable_mosaic.version = 11 : i64} {
  func.func @_graph_atten_kernel(%arg0: i32, %arg1: memref<8x16x128xf32, #tpu.memory_space<vmem>>, %arg2: memref<8x1x1xf32, #tpu.memory_space<vmem>>, %arg3: memref<8x1x1xf32, #tpu.memory_space<vmem>>, %arg4: memref<16x16x1xf32, #tpu.memory_space<vmem>>, %arg5: memref<16x16x1xf32, #tpu.memory_space<vmem>>, %arg6: memref<16x16x1xf32, #tpu.memory_space<vmem>>, %arg7: memref<16x16x128xf32, #tpu.memory_space<vmem>>) attributes {dimension_semantics = [#tpu.dimension_semantics<parallel>], iteration_bounds = array<i64: 1>, scalar_prefetch = 0 : i64, scratch_operands = 0 : i64, tpu.core_type = #tpu.core_type<tc>, window_params = [{transform_indices = @transform_0, window_bounds = array<i64: 8, 16, 128>}, {pipeline_mode = #tpu.pipeline_mode<synchronous>, transform_indices = @transform_1, window_bounds = array<i64: 8, 1, 1>}, {pipeline_mode = #tpu.pipeline_mode<synchronous>, transform_indices = @transform_2, window_bounds = array<i64: 8, 1, 1>}, {pipeline_mode = #tpu.pipeline_mode<synchronous>, transform_indices = @transform_3, window_bounds = array<i64: 16, 16, 1>}, {pipeline_mode = #tpu.pipeline_mode<synchronous>, transform_indices = @transform_4, window_bounds = array<i64: 16, 16, 1>}, {pipeline_mode = #tpu.pipeline_mode<synchronous>, transform_indices = @transform_5, window_bounds = array<i64: 16, 16, 1>}, {transform_indices = @transform_6, window_bounds = array<i64: 16, 16, 128>}]} {
    %c0 = arith.constant 0 : index
    %c0_0 = arith.constant 0 : index
    %c0_1 = arith.constant 0 : index
    %0 = vector.load %arg1[%c0, %c0_0, %c0_1] : memref<8x16x128xf32, #tpu.memory_space<vmem>>, vector<8x16x128xf32>
    %c0_2 = arith.constant 0 : index
    %c0_3 = arith.constant 0 : index
    %c0_4 = arith.constant 0 : index
    %1 = vector.load %arg2[%c0_2, %c0_3, %c0_4] : memref<8x1x1xf32, #tpu.memory_space<vmem>>, vector<8x1x1xf32>
    %2 = vector.broadcast %1 : vector<8x1x1xf32> to vector<8x16x128xf32>
    %3 = arith.mulf %0, %2 : vector<8x16x128xf32>
    %cst = arith.constant dense<0.000000e+00> : vector<16x128xf32>
    %4 = vector.multi_reduction <add>, %3, %cst [0] : vector<8x16x128xf32> to vector<16x128xf32>
    %c0_5 = arith.constant 0 : index
    %c0_6 = arith.constant 0 : index
    %c0_7 = arith.constant 0 : index
    %5 = vector.load %arg3[%c0_5, %c0_6, %c0_7] : memref<8x1x1xf32, #tpu.memory_space<vmem>>, vector<8x1x1xf32>
    %6 = vector.broadcast %5 : vector<8x1x1xf32> to vector<8x16x128xf32>
    %7 = arith.mulf %0, %6 : vector<8x16x128xf32>
    %cst_8 = arith.constant dense<0.000000e+00> : vector<16x128xf32>
    %8 = vector.multi_reduction <add>, %7, %cst_8 [0] : vector<8x16x128xf32> to vector<16x128xf32>
    %9 = vector.shape_cast %4 : vector<16x128xf32> to vector<16x1x128xf32>
    %10 = vector.shape_cast %8 : vector<16x128xf32> to vector<1x16x128xf32>
    %11 = vector.broadcast %9 : vector<16x1x128xf32> to vector<16x16x128xf32>
    %12 = vector.broadcast %10 : vector<1x16x128xf32> to vector<16x16x128xf32>
    %13 = arith.addf %11, %12 : vector<16x16x128xf32>
    %cst_9 = arith.constant 0.00999999977 : f32
    %14 = vector.broadcast %cst_9 : f32 to vector<16x16x128xf32>
    %15 = arith.mulf %14, %13 : vector<16x16x128xf32>
    %16 = arith.maximumf %13, %15 : vector<16x16x128xf32>
    %c0_10 = arith.constant 0 : index
    %c0_11 = arith.constant 0 : index
    %c0_12 = arith.constant 0 : index
    %17 = vector.load %arg4[%c0_10, %c0_11, %c0_12] : memref<16x16x1xf32, #tpu.memory_space<vmem>>, vector<16x16x1xf32>
    %cst_13 = arith.constant 0.000000e+00 : f32
    %18 = vector.broadcast %cst_13 : f32 to vector<16x16x1xf32>
    %19 = arith.cmpf ogt, %17, %18 : vector<16x16x1xf32>
    %cst_14 = arith.constant -9.000000e+15 : f32
    %20 = vector.shape_cast %19 : vector<16x16x1xi1> to vector<16x16x1xi1>
    %21 = vector.broadcast %20 : vector<16x16x1xi1> to vector<16x16x128xi1>
    %22 = vector.broadcast %cst_14 : f32 to vector<16x16x128xf32>
    %23 = arith.select %21, %16, %22 : vector<16x16x128xi1>, vector<16x16x128xf32>
    %cst_15 = arith.constant dense<0xFF800000> : vector<16x128xf32>
    %24 = vector.multi_reduction <maximumf>, %23, %cst_15 [0] : vector<16x16x128xf32> to vector<16x128xf32>
    %25 = vector.shape_cast %24 : vector<16x128xf32> to vector<1x16x128xf32>
    %26 = vector.broadcast %25 : vector<1x16x128xf32> to vector<16x16x128xf32>
    %27 = arith.subf %16, %26 : vector<16x16x128xf32>
    %28 = math.exp %27 : vector<16x16x128xf32>
    %cst_16 = arith.constant 0.000000e+00 : f32
    %29 = vector.shape_cast %19 : vector<16x16x1xi1> to vector<16x16x1xi1>
    %30 = vector.broadcast %29 : vector<16x16x1xi1> to vector<16x16x128xi1>
    %31 = vector.broadcast %cst_16 : f32 to vector<16x16x128xf32>
    %32 = arith.select %30, %28, %31 : vector<16x16x128xi1>, vector<16x16x128xf32>
    %cst_17 = arith.constant dense<0.000000e+00> : vector<16x128xf32>
    %33 = vector.multi_reduction <add>, %32, %cst_17 [0] : vector<16x16x128xf32> to vector<16x128xf32>
    %34 = vector.shape_cast %33 : vector<16x128xf32> to vector<1x16x128xf32>
    %cst_18 = arith.constant 0.000000e+00 : f32
    %35 = vector.broadcast %cst_18 : f32 to vector<1x16x128xf32>
    %36 = arith.cmpf ogt, %34, %35 : vector<1x16x128xf32>
    %cst_19 = arith.constant 1.000000e+00 : f32
    %37 = vector.broadcast %cst_19 : f32 to vector<1x16x128xf32>
    %38 = arith.select %36, %34, %37 : vector<1x16x128xi1>, vector<1x16x128xf32>
    %39 = tpu.reciprocal %38 {approx = true} : vector<1x16x128xf32> -> vector<1x16x128xf32>
    %40 = arith.mulf %38, %39 : vector<1x16x128xf32>
    %cst_20 = arith.constant 2.000000e+00 : f32
    %41 = vector.broadcast %cst_20 : f32 to vector<1x16x128xf32>
    %42 = arith.subf %41, %40 : vector<1x16x128xf32>
    %43 = arith.mulf %39, %42 : vector<1x16x128xf32>
    %cst_21 = arith.constant 0.000000e+00 : f32
    %44 = vector.broadcast %cst_21 : f32 to vector<1x16x128xf32>
    %45 = arith.cmpf ogt, %34, %44 : vector<1x16x128xf32>
    %46 = vector.broadcast %43 : vector<1x16x128xf32> to vector<16x16x128xf32>
    %47 = arith.mulf %32, %46 : vector<16x16x128xf32>
    %cst_22 = arith.constant 6.250000e-02 : f32
    %48 = vector.shape_cast %45 : vector<1x16x128xi1> to vector<1x16x128xi1>
    %49 = vector.broadcast %48 : vector<1x16x128xi1> to vector<16x16x128xi1>
    %50 = vector.broadcast %cst_22 : f32 to vector<16x16x128xf32>
    %51 = arith.select %49, %47, %50 : vector<16x16x128xi1>, vector<16x16x128xf32>
    %c0_23 = arith.constant 0 : index
    %c0_24 = arith.constant 0 : index
    %c0_25 = arith.constant 0 : index
    %52 = vector.load %arg4[%c0_23, %c0_24, %c0_25] : memref<16x16x1xf32, #tpu.memory_space<vmem>>, vector<16x16x1xf32>
    %53 = vector.broadcast %52 : vector<16x16x1xf32> to vector<16x16x128xf32>
    %54 = arith.addf %51, %53 : vector<16x16x128xf32>
    %cst_26 = arith.constant dense<0.000000e+00> : vector<16x128xf32>
    %55 = vector.multi_reduction <add>, %54, %cst_26 [0] : vector<16x16x128xf32> to vector<16x128xf32>
    %56 = vector.shape_cast %55 : vector<16x128xf32> to vector<1x16x128xf32>
    %cst_27 = arith.constant dense<0.000000e+00> : vector<1x128xf32>
    %57 = vector.multi_reduction <add>, %56, %cst_27 [1] : vector<1x16x128xf32> to vector<1x128xf32>
    %58 = vector.shape_cast %57 : vector<1x128xf32> to vector<1x1x128xf32>
    %59 = arith.mulf %54, %54 : vector<16x16x128xf32>
    %cst_28 = arith.constant dense<0.000000e+00> : vector<16x128xf32>
    %60 = vector.multi_reduction <add>, %59, %cst_28 [0] : vector<16x16x128xf32> to vector<16x128xf32>
    %61 = vector.shape_cast %60 : vector<16x128xf32> to vector<1x16x128xf32>
    %cst_29 = arith.constant dense<0.000000e+00> : vector<1x128xf32>
    %62 = vector.multi_reduction <add>, %61, %cst_29 [1] : vector<1x16x128xf32> to vector<1x128xf32>
    %63 = vector.shape_cast %62 : vector<1x128xf32> to vector<1x1x128xf32>
    %cst_30 = arith.constant 3.906250e-03 : f32
    %64 = vector.broadcast %cst_30 : f32 to vector<1x1x128xf32>
    %65 = arith.mulf %58, %64 : vector<1x1x128xf32>
    %cst_31 = arith.constant 3.906250e-03 : f32
    %66 = vector.broadcast %cst_31 : f32 to vector<1x1x128xf32>
    %67 = arith.mulf %63, %66 : vector<1x1x128xf32>
    %68 = arith.mulf %65, %65 : vector<1x1x128xf32>
    %69 = arith.subf %67, %68 : vector<1x1x128xf32>
    %70 = vector.broadcast %65 : vector<1x1x128xf32> to vector<16x16x128xf32>
    %71 = arith.subf %54, %70 : vector<16x16x128xf32>
    %cst_32 = arith.constant 9.99999974E-6 : f32
    %72 = vector.broadcast %cst_32 : f32 to vector<1x1x128xf32>
    %73 = arith.addf %69, %72 : vector<1x1x128xf32>
    %74 = math.rsqrt %73 : vector<1x1x128xf32>
    %75 = vector.broadcast %74 : vector<1x1x128xf32> to vector<16x16x128xf32>
    %76 = arith.mulf %71, %75 : vector<16x16x128xf32>
    %c0_33 = arith.constant 0 : index
    %c0_34 = arith.constant 0 : index
    %c0_35 = arith.constant 0 : index
    %77 = vector.load %arg5[%c0_33, %c0_34, %c0_35] : memref<16x16x1xf32, #tpu.memory_space<vmem>>, vector<16x16x1xf32>
    %78 = vector.broadcast %77 : vector<16x16x1xf32> to vector<16x16x128xf32>
    %79 = arith.mulf %78, %76 : vector<16x16x128xf32>
    %c0_36 = arith.constant 0 : index
    %c0_37 = arith.constant 0 : index
    %c0_38 = arith.constant 0 : index
    %80 = vector.load %arg6[%c0_36, %c0_37, %c0_38] : memref<16x16x1xf32, #tpu.memory_space<vmem>>, vector<16x16x1xf32>
    %81 = vector.broadcast %80 : vector<16x16x1xf32> to vector<16x16x128xf32>
    %82 = arith.addf %79, %81 : vector<16x16x128xf32>
    %c0_39 = arith.constant 0 : index
    %c0_40 = arith.constant 0 : index
    %c0_41 = arith.constant 0 : index
    %83 = vector.load %arg7[%c0_39, %c0_40, %c0_41] : memref<16x16x128xf32, #tpu.memory_space<vmem>>, vector<16x16x128xf32>
    tpu.vector_store %arg7[%c0_39, %c0_40, %c0_41], %82 {strides = array<i32>} : memref<16x16x128xf32, #tpu.memory_space<vmem>>, vector<16x16x128xf32>,
    return
  }
  func.func @transform_0(%arg0: i32) -> (i32, i32, i32) {
    %c0_i32 = arith.constant 0 : i32
    %c0_i32_0 = arith.constant 0 : i32
    %c0_i32_1 = arith.constant 0 : i32
    return %c0_i32, %c0_i32_0, %arg0 : i32, i32, i32
  }
  func.func @transform_1(%arg0: i32) -> (i32, i32, i32) {
    %c0_i32 = arith.constant 0 : i32
    %c0_i32_0 = arith.constant 0 : i32
    %c0_i32_1 = arith.constant 0 : i32
    %c0_i32_2 = arith.constant 0 : i32
    return %c0_i32, %c0_i32_0, %c0_i32_1 : i32, i32, i32
  }
  func.func @transform_2(%arg0: i32) -> (i32, i32, i32) {
    %c0_i32 = arith.constant 0 : i32
    %c0_i32_0 = arith.constant 0 : i32
    %c0_i32_1 = arith.constant 0 : i32
    %c0_i32_2 = arith.constant 0 : i32
    return %c0_i32, %c0_i32_0, %c0_i32_1 : i32, i32, i32
  }
  func.func @transform_3(%arg0: i32) -> (i32, i32, i32) {
    %c0_i32 = arith.constant 0 : i32
    %c0_i32_0 = arith.constant 0 : i32
    %c0_i32_1 = arith.constant 0 : i32
    %c0_i32_2 = arith.constant 0 : i32
    return %c0_i32, %c0_i32_0, %c0_i32_1 : i32, i32, i32
  }
  func.func @transform_4(%arg0: i32) -> (i32, i32, i32) {
    %c0_i32 = arith.constant 0 : i32
    %c0_i32_0 = arith.constant 0 : i32
    %c0_i32_1 = arith.constant 0 : i32
    %c0_i32_2 = arith.constant 0 : i32
    return %c0_i32, %c0_i32_0, %c0_i32_1 : i32, i32, i32
  }
  func.func @transform_5(%arg0: i32) -> (i32, i32, i32) {
    %c0_i32 = arith.constant 0 : i32
    %c0_i32_0 = arith.constant 0 : i32
    %c0_i32_1 = arith.constant 0 : i32
    %c0_i32_2 = arith.constant 0 : i32
    return %c0_i32, %c0_i32_0, %c0_i32_1 : i32, i32, i32
  }
  func.func @transform_6(%arg0: i32) -> (i32, i32, i32) {
    %c0_i32 = arith.constant 0 : i32
    %c0_i32_0 = arith.constant 0 : i32
    %c0_i32_1 = arith.constant 0 : i32
    return %c0_i32, %c0_i32_0, %arg0 : i32, i32, i32
  }
}

</mosaic_0001>

<llo_original>
// kernel: tpu_custom_call.1
$region0: #{tpu_custom_call.1}
  #allocation0 [shape = 'u32[]', space=smem, size = 0x4, offset = 0x4, fixed_abs, tag = 'smem constant byte address 0x4 - core index']
  #allocation1 [shape = 'u32[72,128]{1,0:T(1,128)}', space=vmem, size = 0x9000, scoped, tag = 'internal scratch']
  %s0 = inlined_call_operand.vmem [shape: f32[8,16,128], index: 0, kind: input, shape index: {}]
  %s1 = inlined_call_operand.vmem [shape: f32[8,1,1], index: 1, kind: input, shape index: {}]
  %s2 = inlined_call_operand.vmem [shape: f32[8,1,1], index: 2, kind: input, shape index: {}]
  %s3 = inlined_call_operand.vmem [shape: f32[16,16,1], index: 3, kind: input, shape index: {}]
  %s4 = inlined_call_operand.vmem [shape: f32[16,16,1], index: 4, kind: input, shape index: {}]
  %s5 = inlined_call_operand.vmem [shape: f32[16,16,1], index: 5, kind: input, shape index: {}]
  %s6 = inlined_call_operand.hbm [shape: f32[16,16,128], index: 6, kind: output, shape index: {}]
  %s7 = sld [smem:[#allocation0]]
  $region34: #{tpu_custom_call.1} parent=0
    _
  %s9 = ssub.s32 1, %s7
  %s10 = scalar_select 0, %s9, %s7
  $region1: #{tpu_custom_call.1} parent=0
    #allocation2 [shape = 'u8[131072]{0}', space=vmem, size = 0x20000, scoped, tag = 'output window, operand 0, single buffered']
    #allocation3 [shape = 's32[1]{0}', space=sflag, size = 0x4, scoped, tag = 'scoped memory for tpu_custom_call.1']
    %11 = vsyncpa [#allocation3], 0
    // Predicated region
    $region2: #{tpu_custom_call.1} parent=1 // pred_check
      _
    $region3: #{tpu_custom_call.1} parent=1 // pred_check_branch
      %13 = sbr.rel (0) target = $region5
    $region4: #{tpu_custom_call.1} parent=1 // pred_region
      _
    $region5: #{tpu_custom_call.1} parent=1 // pred_fallthru
      _
    // Predicated region
    $region6: #{tpu_custom_call.1} parent=1 // pred_check
      _
    $region7: #{tpu_custom_call.1} parent=1 // pred_check_branch
      %15 = sbr.rel (0) target = $region9
    $region8: #{tpu_custom_call.1} parent=1 // pred_region
      _
    $region9: #{tpu_custom_call.1} parent=1 // pred_fallthru
      _
    // Predicated region
    $region10: #{tpu_custom_call.1} parent=1 // pred_check
      _
    $region11: #{tpu_custom_call.1} parent=1 // pred_check_branch
      %17 = sbr.rel (0) target = $region13
    $region12: #{tpu_custom_call.1} parent=1 // pred_region
      _
    $region13: #{tpu_custom_call.1} parent=1 // pred_fallthru
      _
    // Predicated region
    $region14: #{tpu_custom_call.1} parent=1 // pred_check
      _
    $region15: #{tpu_custom_call.1} parent=1 // pred_check_branch
      %19 = sbr.rel (0) target = $region17
    $region16: #{tpu_custom_call.1} parent=1 // pred_region
      _
    $region17: #{tpu_custom_call.1} parent=1 // pred_fallthru
      _
    // Predicated region
    $region18: #{tpu_custom_call.1} parent=1 // pred_check
      _
    $region19: #{tpu_custom_call.1} parent=1 // pred_check_branch
      %21 = sbr.rel (0) target = $region21
    $region20: #{tpu_custom_call.1} parent=1 // pred_region
      _
    $region21: #{tpu_custom_call.1} parent=1 // pred_fallthru
      _
    // Predicated region
    $region22: #{tpu_custom_call.1} parent=1 // pred_check
      _
    $region23: #{tpu_custom_call.1} parent=1 // pred_check_branch
      %23 = sbr.rel (0) target = $region25
    $region24: #{tpu_custom_call.1} parent=1 // pred_region
      _
    $region25: #{tpu_custom_call.1} parent=1 // pred_fallthru
      _
    %v24 = vld [vmem:[%s0] sm:$0xff]
    %v25 = vld [vmem:[%s0 + $0x8] sm:$0xff]
    %v26 = vld [vmem:[%s0 + $0x10] sm:$0xff]
    %v27 = vld [vmem:[%s0 + $0x18] sm:$0xff]
    %v28 = vld [vmem:[%s0 + $0x20] sm:$0xff]
    %v29 = vld [vmem:[%s0 + $0x28] sm:$0xff]
    %v30 = vld [vmem:[%s0 + $0x30] sm:$0xff]
    %v31 = vld [vmem:[%s0 + $0x38] sm:$0xff]
    %v32 = vld [vmem:[%s0 + $0x40] sm:$0xff]
    %v33 = vld [vmem:[%s0 + $0x48] sm:$0xff]
    %v34 = vld [vmem:[%s0 + $0x50] sm:$0xff]
    %v35 = vld [vmem:[%s0 + $0x58] sm:$0xff]
    %v36 = vld [vmem:[%s0 + $0x60] sm:$0xff]
    %v37 = vld [vmem:[%s0 + $0x68] sm:$0xff]
    %v38 = vld [vmem:[%s0 + $0x70] sm:$0xff]
    %v39 = vld [vmem:[%s0 + $0x78] sm:$0xff]
    %v40 = vld [vmem:[%s1] sm:$0x1]
    %v41 = vld [vmem:[%s1 + $0x1] sm:$0x1]
    %v42 = vld [vmem:[%s1 + $0x2] sm:$0x1]
    %v43 = vld [vmem:[%s1 + $0x3] sm:$0x1]
    %v44 = vld [vmem:[%s1 + $0x4] sm:$0x1]
    %v45 = vld [vmem:[%s1 + $0x5] sm:$0x1]
    %v46 = vld [vmem:[%s1 + $0x6] sm:$0x1]
    %v47 = vld [vmem:[%s1 + $0x7] sm:$0x1]
    %v56 = vperm.slane %v40, 0
    %v57 = vperm.slane %v41, 0
    %v58 = vperm.slane %v42, 0
    %v59 = vperm.slane %v43, 0
    %v60 = vperm.slane %v44, 0
    %v61 = vperm.slane %v45, 0
    %v62 = vperm.slane %v46, 0
    %v63 = vperm.slane %v47, 0
    %64 = vset.pattern.permute.xlu0 0
    %65 = vperm.xlu0 %64, %v56
    %v66 = vpop.permute.xlu0 %65
    %68 = vset.pattern.permute.xlu0 0
    %69 = vperm.xlu0 %68, %v57
    %v70 = vpop.permute.xlu0 %69
    %72 = vset.pattern.permute.xlu0 0
    %73 = vperm.xlu0 %72, %v58
    %v74 = vpop.permute.xlu0 %73
    %76 = vset.pattern.permute.xlu0 0
    %77 = vperm.xlu0 %76, %v59
    %v78 = vpop.permute.xlu0 %77
    %80 = vset.pattern.permute.xlu0 0
    %81 = vperm.xlu0 %80, %v60
    %v82 = vpop.permute.xlu0 %81
    %84 = vset.pattern.permute.xlu0 0
    %85 = vperm.xlu0 %84, %v61
    %v86 = vpop.permute.xlu0 %85
    %88 = vset.pattern.permute.xlu0 0
    %89 = vperm.xlu0 %88, %v62
    %v90 = vpop.permute.xlu0 %89
    %92 = vset.pattern.permute.xlu0 0
    %93 = vperm.xlu0 %92, %v63
    %v94 = vpop.permute.xlu0 %93
    %v96 = vmul.f32 %v24, %v66
    %v97 = vmul.f32 %v25, %v66
    %v98 = vmul.f32 %v26, %v70
    %v99 = vmul.f32 %v27, %v70
    %v100 = vmul.f32 %v28, %v74
    %v101 = vmul.f32 %v29, %v74
    %v102 = vmul.f32 %v30, %v78
    %v103 = vmul.f32 %v31, %v78
    %v104 = vmul.f32 %v32, %v82
    %v105 = vmul.f32 %v33, %v82
    %v106 = vmul.f32 %v34, %v86
    %v107 = vmul.f32 %v35, %v86
    %v108 = vmul.f32 %v36, %v90
    %v109 = vmul.f32 %v37, %v90
    %v110 = vmul.f32 %v38, %v94
    %v111 = vmul.f32 %v39, %v94
    %v112 = vadd.f32 %v96, %v98
    %v113 = vadd.f32 %v112, %v100
    %v114 = vadd.f32 %v113, %v102
    %v115 = vadd.f32 %v114, %v104
    %v116 = vadd.f32 %v115, %v106
    %v117 = vadd.f32 %v116, %v108
    %v118 = vadd.f32 %v117, %v110
    %v119 = vadd.f32 %v97, %v99
    %v120 = vadd.f32 %v119, %v101
    %v121 = vadd.f32 %v120, %v103
    %v122 = vadd.f32 %v121, %v105
    %v123 = vadd.f32 %v122, %v107
    %v124 = vadd.f32 %v123, %v109
    %v125 = vadd.f32 %v124, %v111
    %v126 = vld [vmem:[%s2] sm:$0x1]
    %v127 = vld [vmem:[%s2 + $0x1] sm:$0x1]
    %v128 = vld [vmem:[%s2 + $0x2] sm:$0x1]
    %v129 = vld [vmem:[%s2 + $0x3] sm:$0x1]
    %v130 = vld [vmem:[%s2 + $0x4] sm:$0x1]
    %v131 = vld [vmem:[%s2 + $0x5] sm:$0x1]
    %v132 = vld [vmem:[%s2 + $0x6] sm:$0x1]
    %v133 = vld [vmem:[%s2 + $0x7] sm:$0x1]
    %v142 = vperm.slane %v126, 0
    %v143 = vperm.slane %v127, 0
    %v144 = vperm.slane %v128, 0
    %v145 = vperm.slane %v129, 0
    %v146 = vperm.slane %v130, 0
    %v147 = vperm.slane %v131, 0
    %v148 = vperm.slane %v132, 0
    %v149 = vperm.slane %v133, 0
    %150 = vset.pattern.permute.xlu0 0
    %151 = vperm.xlu0 %150, %v142
    %v152 = vpop.permute.xlu0 %151
    %154 = vset.pattern.permute.xlu0 0
    %155 = vperm.xlu0 %154, %v143
    %v156 = vpop.permute.xlu0 %155
    %158 = vset.pattern.permute.xlu0 0
    %159 = vperm.xlu0 %158, %v144
    %v160 = vpop.permute.xlu0 %159
    %162 = vset.pattern.permute.xlu0 0
    %163 = vperm.xlu0 %162, %v145
    %v164 = vpop.permute.xlu0 %163
    %166 = vset.pattern.permute.xlu0 0
    %167 = vperm.xlu0 %166, %v146
    %v168 = vpop.permute.xlu0 %167
    %170 = vset.pattern.permute.xlu0 0
    %171 = vperm.xlu0 %170, %v147
    %v172 = vpop.permute.xlu0 %171
    %174 = vset.pattern.permute.xlu0 0
    %175 = vperm.xlu0 %174, %v148
    %v176 = vpop.permute.xlu0 %175
    %178 = vset.pattern.permute.xlu0 0
    %179 = vperm.xlu0 %178, %v149
    %v180 = vpop.permute.xlu0 %179
    %v182 = vmul.f32 %v24, %v152
    %v183 = vmul.f32 %v25, %v152
    %v184 = vmul.f32 %v26, %v156
    %v185 = vmul.f32 %v27, %v156
    %v186 = vmul.f32 %v28, %v160
    %v187 = vmul.f32 %v29, %v160
    %v188 = vmul.f32 %v30, %v164
    %v189 = vmul.f32 %v31, %v164
    %v190 = vmul.f32 %v32, %v168
    %v191 = vmul.f32 %v33, %v168
    %v192 = vmul.f32 %v34, %v172
    %v193 = vmul.f32 %v35, %v172
    %v194 = vmul.f32 %v36, %v176
    %v195 = vmul.f32 %v37, %v176
    %v196 = vmul.f32 %v38, %v180
    %v197 = vmul.f32 %v39, %v180
    %v198 = vadd.f32 %v182, %v184
    %v199 = vadd.f32 %v198, %v186
    %v200 = vadd.f32 %v199, %v188
    %v201 = vadd.f32 %v200, %v190
    %v202 = vadd.f32 %v201, %v192
    %v203 = vadd.f32 %v202, %v194
    %v204 = vadd.f32 %v203, %v196
    %v205 = vadd.f32 %v183, %v185
    %v206 = vadd.f32 %v205, %v187
    %v207 = vadd.f32 %v206, %v189
    %v208 = vadd.f32 %v207, %v191
    %v209 = vadd.f32 %v208, %v193
    %v210 = vadd.f32 %v209, %v195
    %v211 = vadd.f32 %v210, %v197
    %v214 = vrot.slane %v118, 1
    %v215 = vrot.slane %v118, 2
    %v216 = vrot.slane %v118, 3
    %v217 = vrot.slane %v118, 4
    %v218 = vrot.slane %v118, 5
    %v219 = vrot.slane %v118, 6
    %v220 = vrot.slane %v118, 7
    %v221 = vrot.slane %v125, 1
    %v222 = vrot.slane %v125, 2
    %v223 = vrot.slane %v125, 3
    %v224 = vrot.slane %v125, 4
    %v225 = vrot.slane %v125, 5
    %v226 = vrot.slane %v125, 6
    %v227 = vrot.slane %v125, 7
    %v228 = vperm.slane %v118, 0
    %v229 = vperm.slane %v214, 0
    %v230 = vperm.slane %v215, 0
    %v231 = vperm.slane %v216, 0
    %v232 = vperm.slane %v217, 0
    %v233 = vperm.slane %v218, 0
    %v234 = vperm.slane %v219, 0
    %v235 = vperm.slane %v220, 0
    %v236 = vperm.slane %v125, 0
    %v237 = vperm.slane %v221, 0
    %v238 = vperm.slane %v222, 0
    %v239 = vperm.slane %v223, 0
    %v240 = vperm.slane %v224, 0
    %v241 = vperm.slane %v225, 0
    %v242 = vperm.slane %v226, 0
    %v243 = vperm.slane %v227, 0
    %v260 = vadd.f32 %v228, %v204
    %v261 = vadd.f32 %v228, %v211
    %v262 = vadd.f32 %v229, %v204
    %v263 = vadd.f32 %v229, %v211
    %v264 = vadd.f32 %v230, %v204
    %v265 = vadd.f32 %v230, %v211
    %v266 = vadd.f32 %v231, %v204
    %v267 = vadd.f32 %v231, %v211
    %v268 = vadd.f32 %v232, %v204
    %v269 = vadd.f32 %v232, %v211
    %v270 = vadd.f32 %v233, %v204
    %v271 = vadd.f32 %v233, %v211
    %v272 = vadd.f32 %v234, %v204
    %v273 = vadd.f32 %v234, %v211
    %v274 = vadd.f32 %v235, %v204
    %v275 = vadd.f32 %v235, %v211
    %v276 = vadd.f32 %v236, %v204
    %v277 = vadd.f32 %v236, %v211
    %v278 = vadd.f32 %v237, %v204
    %v279 = vadd.f32 %v237, %v211
    %v280 = vadd.f32 %v238, %v204
    %v281 = vadd.f32 %v238, %v211
    %v282 = vadd.f32 %v239, %v204
    %v283 = vadd.f32 %v239, %v211
    %v284 = vadd.f32 %v240, %v204
    %v285 = vadd.f32 %v240, %v211
    %v286 = vadd.f32 %v241, %v204
    %v287 = vadd.f32 %v241, %v211
    %v288 = vadd.f32 %v242, %v204
    %v289 = vadd.f32 %v242, %v211
    %v290 = vadd.f32 %v243, %v204
    %v291 = vadd.f32 %v243, %v211
    %v292 = vmul.f32 %v260, 0.01
    %v293 = vmul.f32 %v261, 0.01
    %v294 = vmul.f32 %v262, 0.01
    %v295 = vmul.f32 %v263, 0.01
    %v296 = vmul.f32 %v264, 0.01
    %v297 = vmul.f32 %v265, 0.01
    %v298 = vmul.f32 %v266, 0.01
    %v299 = vmul.f32 %v267, 0.01
    %v300 = vmul.f32 %v268, 0.01
    %v301 = vmul.f32 %v269, 0.01
    %v302 = vmul.f32 %v270, 0.01
    %v303 = vmul.f32 %v271, 0.01
    %v304 = vmul.f32 %v272, 0.01
    %v305 = vmul.f32 %v273, 0.01
    %v306 = vmul.f32 %v274, 0.01
    %v307 = vmul.f32 %v275, 0.01
    %v308 = vmul.f32 %v276, 0.01
    %v309 = vmul.f32 %v277, 0.01
    %v310 = vmul.f32 %v278, 0.01
    %v311 = vmul.f32 %v279, 0.01
    %v312 = vmul.f32 %v280, 0.01
    %v313 = vmul.f32 %v281, 0.01
    %v314 = vmul.f32 %v282, 0.01
    %v315 = vmul.f32 %v283, 0.01
    %v316 = vmul.f32 %v284, 0.01
    %v317 = vmul.f32 %v285, 0.01
    %v318 = vmul.f32 %v286, 0.01
    %v319 = vmul.f32 %v287, 0.01
    %v320 = vmul.f32 %v288, 0.01
    %v321 = vmul.f32 %v289, 0.01
    %v322 = vmul.f32 %v290, 0.01
    %v323 = vmul.f32 %v291, 0.01
    %v324 = vmax.f32 %v260, %v292
    %v325 = vmax.f32 %v261, %v293
    %v326 = vmax.f32 %v262, %v294
    %v327 = vmax.f32 %v263, %v295
    %v328 = vmax.f32 %v264, %v296
    %v329 = vmax.f32 %v265, %v297
    %v330 = vmax.f32 %v266, %v298
    %v331 = vmax.f32 %v267, %v299
    %v332 = vmax.f32 %v268, %v300
    %v333 = vmax.f32 %v269, %v301
    %v334 = vmax.f32 %v270, %v302
    %v335 = vmax.f32 %v271, %v303
    %v336 = vmax.f32 %v272, %v304
    %v337 = vmax.f32 %v273, %v305
    %v338 = vmax.f32 %v274, %v306
    %v339 = vmax.f32 %v275, %v307
    %v340 = vmax.f32 %v276, %v308
    %v341 = vmax.f32 %v277, %v309
    %v342 = vmax.f32 %v278, %v310
    %v343 = vmax.f32 %v279, %v311
    %v344 = vmax.f32 %v280, %v312
    %v345 = vmax.f32 %v281, %v313
    %v346 = vmax.f32 %v282, %v314
    %v347 = vmax.f32 %v283, %v315
    %v348 = vmax.f32 %v284, %v316
    %v349 = vmax.f32 %v285, %v317
    %v350 = vmax.f32 %v286, %v318
    %v351 = vmax.f32 %v287, %v319
    %v352 = vmax.f32 %v288, %v320
    %v353 = vmax.f32 %v289, %v321
    %v354 = vmax.f32 %v290, %v322
    %v355 = vmax.f32 %v291, %v323
    %v356 = vld [vmem:[%s3] sm:$0xff]
    %v357 = vld [vmem:[%s3 + $0x8] sm:$0xff]
    %v358 = vld [vmem:[%s3 + $0x10] sm:$0xff]
    %v359 = vld [vmem:[%s3 + $0x18] sm:$0xff]
    %v360 = vld [vmem:[%s3 + $0x20] sm:$0xff]
    %v361 = vld [vmem:[%s3 + $0x28] sm:$0xff]
    %v362 = vld [vmem:[%s3 + $0x30] sm:$0xff]
    %v363 = vld [vmem:[%s3 + $0x38] sm:$0xff]
    %v364 = vld [vmem:[%s3 + $0x40] sm:$0xff]
    %v365 = vld [vmem:[%s3 + $0x48] sm:$0xff]
    %v366 = vld [vmem:[%s3 + $0x50] sm:$0xff]
    %v367 = vld [vmem:[%s3 + $0x58] sm:$0xff]
    %v368 = vld [vmem:[%s3 + $0x60] sm:$0xff]
    %v369 = vld [vmem:[%s3 + $0x68] sm:$0xff]
    %v370 = vld [vmem:[%s3 + $0x70] sm:$0xff]
    %v371 = vld [vmem:[%s3 + $0x78] sm:$0xff]
    %v372 = vld [vmem:[%s3 + $0x80] sm:$0xff]
    %v373 = vld [vmem:[%s3 + $0x88] sm:$0xff]
    %v374 = vld [vmem:[%s3 + $0x90] sm:$0xff]
    %v375 = vld [vmem:[%s3 + $0x98] sm:$0xff]
    %v376 = vld [vmem:[%s3 + $0xa0] sm:$0xff]
    %v377 = vld [vmem:[%s3 + $0xa8] sm:$0xff]
    %v378 = vld [vmem:[%s3 + $0xb0] sm:$0xff]
    %v379 = vld [vmem:[%s3 + $0xb8] sm:$0xff]
    %v380 = vld [vmem:[%s3 + $0xc0] sm:$0xff]
    %v381 = vld [vmem:[%s3 + $0xc8] sm:$0xff]
    %v382 = vld [vmem:[%s3 + $0xd0] sm:$0xff]
    %v383 = vld [vmem:[%s3 + $0xd8] sm:$0xff]
    %v384 = vld [vmem:[%s3 + $0xe0] sm:$0xff]
    %v385 = vld [vmem:[%s3 + $0xe8] sm:$0xff]
    %v386 = vld [vmem:[%s3 + $0xf0] sm:$0xff]
    %v387 = vld [vmem:[%s3 + $0xf8] sm:$0xff]
    %vm388 = vcmp.gt.f32.partialorder %v356, 0.0
    %vm389 = vcmp.gt.f32.partialorder %v357, 0.0
    %vm390 = vcmp.gt.f32.partialorder %v358, 0.0
    %vm391 = vcmp.gt.f32.partialorder %v359, 0.0
    %vm392 = vcmp.gt.f32.partialorder %v360, 0.0
    %vm393 = vcmp.gt.f32.partialorder %v361, 0.0
    %vm394 = vcmp.gt.f32.partialorder %v362, 0.0
    %vm395 = vcmp.gt.f32.partialorder %v363, 0.0
    %vm396 = vcmp.gt.f32.partialorder %v364, 0.0
    %vm397 = vcmp.gt.f32.partialorder %v365, 0.0
    %vm398 = vcmp.gt.f32.partialorder %v366, 0.0
    %vm399 = vcmp.gt.f32.partialorder %v367, 0.0
    %vm400 = vcmp.gt.f32.partialorder %v368, 0.0
    %vm401 = vcmp.gt.f32.partialorder %v369, 0.0
    %vm402 = vcmp.gt.f32.partialorder %v370, 0.0
    %vm403 = vcmp.gt.f32.partialorder %v371, 0.0
    %vm404 = vcmp.gt.f32.partialorder %v372, 0.0
    %vm405 = vcmp.gt.f32.partialorder %v373, 0.0
    %vm406 = vcmp.gt.f32.partialorder %v374, 0.0
    %vm407 = vcmp.gt.f32.partialorder %v375, 0.0
    %vm408 = vcmp.gt.f32.partialorder %v376, 0.0
    %vm409 = vcmp.gt.f32.partialorder %v377, 0.0
    %vm410 = vcmp.gt.f32.partialorder %v378, 0.0
    %vm411 = vcmp.gt.f32.partialorder %v379, 0.0
    %vm412 = vcmp.gt.f32.partialorder %v380, 0.0
    %vm413 = vcmp.gt.f32.partialorder %v381, 0.0
    %vm414 = vcmp.gt.f32.partialorder %v382, 0.0
    %vm415 = vcmp.gt.f32.partialorder %v383, 0.0
    %vm416 = vcmp.gt.f32.partialorder %v384, 0.0
    %vm417 = vcmp.gt.f32.partialorder %v385, 0.0
    %vm418 = vcmp.gt.f32.partialorder %v386, 0.0
    %vm419 = vcmp.gt.f32.partialorder %v387, 0.0
    %v420 = vsel %vm388, 1, 0
    %v421 = vsel %vm389, 1, 0
    %v422 = vsel %vm390, 1, 0
    %v423 = vsel %vm391, 1, 0
    %v424 = vsel %vm392, 1, 0
    %v425 = vsel %vm393, 1, 0
    %v426 = vsel %vm394, 1, 0
    %v427 = vsel %vm395, 1, 0
    %v428 = vsel %vm396, 1, 0
    %v429 = vsel %vm397, 1, 0
    %v430 = vsel %vm398, 1, 0
    %v431 = vsel %vm399, 1, 0
    %v432 = vsel %vm400, 1, 0
    %v433 = vsel %vm401, 1, 0
    %v434 = vsel %vm402, 1, 0
    %v435 = vsel %vm403, 1, 0
    %v436 = vsel %vm404, 1, 0
    %v437 = vsel %vm405, 1, 0
    %v438 = vsel %vm406, 1, 0
    %v439 = vsel %vm407, 1, 0
    %v440 = vsel %vm408, 1, 0
    %v441 = vsel %vm409, 1, 0
    %v442 = vsel %vm410, 1, 0
    %v443 = vsel %vm411, 1, 0
    %v444 = vsel %vm412, 1, 0
    %v445 = vsel %vm413, 1, 0
    %v446 = vsel %vm414, 1, 0
    %v447 = vsel %vm415, 1, 0
    %v448 = vsel %vm416, 1, 0
    %v449 = vsel %vm417, 1, 0
    %v450 = vsel %vm418, 1, 0
    %v451 = vsel %vm419, 1, 0
    %452 = vset.pattern.permute.xlu0 0
    %453 = vperm.xlu0 %452, %v420
    %v454 = vpop.permute.xlu0 %453
    %455 = vset.pattern.permute.xlu0 0
    %456 = vperm.xlu0 %455, %v421
    %v457 = vpop.permute.xlu0 %456
    %458 = vset.pattern.permute.xlu0 0
    %459 = vperm.xlu0 %458, %v422
    %v460 = vpop.permute.xlu0 %459
    %461 = vset.pattern.permute.xlu0 0
    %462 = vperm.xlu0 %461, %v423
    %v463 = vpop.permute.xlu0 %462
    %464 = vset.pattern.permute.xlu0 0
    %465 = vperm.xlu0 %464, %v424
    %v466 = vpop.permute.xlu0 %465
    %467 = vset.pattern.permute.xlu0 0
    %468 = vperm.xlu0 %467, %v425
    %v469 = vpop.permute.xlu0 %468
    %470 = vset.pattern.permute.xlu0 0
    %471 = vperm.xlu0 %470, %v426
    %v472 = vpop.permute.xlu0 %471
    %473 = vset.pattern.permute.xlu0 0
    %474 = vperm.xlu0 %473, %v427
    %v475 = vpop.permute.xlu0 %474
    %476 = vset.pattern.permute.xlu0 0
    %477 = vperm.xlu0 %476, %v428
    %v478 = vpop.permute.xlu0 %477
    %479 = vset.pattern.permute.xlu0 0
    %480 = vperm.xlu0 %479, %v429
    %v481 = vpop.permute.xlu0 %480
    %482 = vset.pattern.permute.xlu0 0
    %483 = vperm.xlu0 %482, %v430
    %v484 = vpop.permute.xlu0 %483
    %485 = vset.pattern.permute.xlu0 0
    %486 = vperm.xlu0 %485, %v431
    %v487 = vpop.permute.xlu0 %486
    %488 = vset.pattern.permute.xlu0 0
    %489 = vperm.xlu0 %488, %v432
    %v490 = vpop.permute.xlu0 %489
    %491 = vset.pattern.permute.xlu0 0
    %492 = vperm.xlu0 %491, %v433
    %v493 = vpop.permute.xlu0 %492
    %494 = vset.pattern.permute.xlu0 0
    %495 = vperm.xlu0 %494, %v434
    %v496 = vpop.permute.xlu0 %495
    %497 = vset.pattern.permute.xlu0 0
    %498 = vperm.xlu0 %497, %v435
    %v499 = vpop.permute.xlu0 %498
    %500 = vset.pattern.permute.xlu0 0
    %501 = vperm.xlu0 %500, %v436
    %v502 = vpop.permute.xlu0 %501
    %503 = vset.pattern.permute.xlu0 0
    %504 = vperm.xlu0 %503, %v437
    %v505 = vpop.permute.xlu0 %504
    %506 = vset.pattern.permute.xlu0 0
    %507 = vperm.xlu0 %506, %v438
    %v508 = vpop.permute.xlu0 %507
    %509 = vset.pattern.permute.xlu0 0
    %510 = vperm.xlu0 %509, %v439
    %v511 = vpop.permute.xlu0 %510
    %512 = vset.pattern.permute.xlu0 0
    %513 = vperm.xlu0 %512, %v440
    %v514 = vpop.permute.xlu0 %513
    %515 = vset.pattern.permute.xlu0 0
    %516 = vperm.xlu0 %515, %v441
    %v517 = vpop.permute.xlu0 %516
    %518 = vset.pattern.permute.xlu0 0
    %519 = vperm.xlu0 %518, %v442
    %v520 = vpop.permute.xlu0 %519
    %521 = vset.pattern.permute.xlu0 0
    %522 = vperm.xlu0 %521, %v443
    %v523 = vpop.permute.xlu0 %522
    %524 = vset.pattern.permute.xlu0 0
    %525 = vperm.xlu0 %524, %v444
    %v526 = vpop.permute.xlu0 %525
    %527 = vset.pattern.permute.xlu0 0
    %528 = vperm.xlu0 %527, %v445
    %v529 = vpop.permute.xlu0 %528
    %530 = vset.pattern.permute.xlu0 0
    %531 = vperm.xlu0 %530, %v446
    %v532 = vpop.permute.xlu0 %531
    %533 = vset.pattern.permute.xlu0 0
    %534 = vperm.xlu0 %533, %v447
    %v535 = vpop.permute.xlu0 %534
    %536 = vset.pattern.permute.xlu0 0
    %537 = vperm.xlu0 %536, %v448
    %v538 = vpop.permute.xlu0 %537
    %539 = vset.pattern.permute.xlu0 0
    %540 = vperm.xlu0 %539, %v449
    %v541 = vpop.permute.xlu0 %540
    %542 = vset.pattern.permute.xlu0 0
    %543 = vperm.xlu0 %542, %v450
    %v544 = vpop.permute.xlu0 %543
    %545 = vset.pattern.permute.xlu0 0
    %546 = vperm.xlu0 %545, %v451
    %v547 = vpop.permute.xlu0 %546
    %vm548 = vcmp.eq.s32.totalorder %v454, 1
    %vm549 = vcmp.eq.s32.totalorder %v457, 1
    %vm550 = vcmp.eq.s32.totalorder %v460, 1
    %vm551 = vcmp.eq.s32.totalorder %v463, 1
    %vm552 = vcmp.eq.s32.totalorder %v466, 1
    %vm553 = vcmp.eq.s32.totalorder %v469, 1
    %vm554 = vcmp.eq.s32.totalorder %v472, 1
    %vm555 = vcmp.eq.s32.totalorder %v475, 1
    %vm556 = vcmp.eq.s32.totalorder %v478, 1
    %vm557 = vcmp.eq.s32.totalorder %v481, 1
    %vm558 = vcmp.eq.s32.totalorder %v484, 1
    %vm559 = vcmp.eq.s32.totalorder %v487, 1
    %vm560 = vcmp.eq.s32.totalorder %v490, 1
    %vm561 = vcmp.eq.s32.totalorder %v493, 1
    %vm562 = vcmp.eq.s32.totalorder %v496, 1
    %vm563 = vcmp.eq.s32.totalorder %v499, 1
    %vm564 = vcmp.eq.s32.totalorder %v502, 1
    %vm565 = vcmp.eq.s32.totalorder %v505, 1
    %vm566 = vcmp.eq.s32.totalorder %v508, 1
    %vm567 = vcmp.eq.s32.totalorder %v511, 1
    %vm568 = vcmp.eq.s32.totalorder %v514, 1
    %vm569 = vcmp.eq.s32.totalorder %v517, 1
    %vm570 = vcmp.eq.s32.totalorder %v520, 1
    %vm571 = vcmp.eq.s32.totalorder %v523, 1
    %vm572 = vcmp.eq.s32.totalorder %v526, 1
    %vm573 = vcmp.eq.s32.totalorder %v529, 1
    %vm574 = vcmp.eq.s32.totalorder %v532, 1
    %vm575 = vcmp.eq.s32.totalorder %v535, 1
    %vm576 = vcmp.eq.s32.totalorder %v538, 1
    %vm577 = vcmp.eq.s32.totalorder %v541, 1
    %vm578 = vcmp.eq.s32.totalorder %v544, 1
    %vm579 = vcmp.eq.s32.totalorder %v547, 1
    %v580 = vsel %vm548, %v324, -9e+15
    %v581 = vsel %vm549, %v325, -9e+15
    %v582 = vsel %vm550, %v326, -9e+15
    %v583 = vsel %vm551, %v327, -9e+15
    %v584 = vsel %vm552, %v328, -9e+15
    %v585 = vsel %vm553, %v329, -9e+15
    %v586 = vsel %vm554, %v330, -9e+15
    %v587 = vsel %vm555, %v331, -9e+15
    %v588 = vsel %vm556, %v332, -9e+15
    %v589 = vsel %vm557, %v333, -9e+15
    %v590 = vsel %vm558, %v334, -9e+15
    %v591 = vsel %vm559, %v335, -9e+15
    %v592 = vsel %vm560, %v336, -9e+15
    %v593 = vsel %vm561, %v337, -9e+15
    %v594 = vsel %vm562, %v338, -9e+15
    %v595 = vsel %vm563, %v339, -9e+15
    %v596 = vsel %vm564, %v340, -9e+15
    %v597 = vsel %vm565, %v341, -9e+15
    %v598 = vsel %vm566, %v342, -9e+15
    %v599 = vsel %vm567, %v343, -9e+15
    %v600 = vsel %vm568, %v344, -9e+15
    %v601 = vsel %vm569, %v345, -9e+15
    %v602 = vsel %vm570, %v346, -9e+15
    %v603 = vsel %vm571, %v347, -9e+15
    %v604 = vsel %vm572, %v348, -9e+15
    %v605 = vsel %vm573, %v349, -9e+15
    %v606 = vsel %vm574, %v350, -9e+15
    %v607 = vsel %vm575, %v351, -9e+15
    %v608 = vsel %vm576, %v352, -9e+15
    %v609 = vsel %vm577, %v353, -9e+15
    %v610 = vsel %vm578, %v354, -9e+15
    %v611 = vsel %vm579, %v355, -9e+15
    %v612 = vmax.f32 %v580, %v584
    %v613 = vmax.f32 %v582, %v586
    %v614 = vmax.f32 %v612, %v588
    %v615 = vmax.f32 %v613, %v590
    %v616 = vmax.f32 %v614, %v592
    %v617 = vmax.f32 %v615, %v594
    %v618 = vmax.f32 %v616, %v596
    %v619 = vmax.f32 %v617, %v598
    %v620 = vmax.f32 %v618, %v600
    %v621 = vmax.f32 %v619, %v602
    %v622 = vmax.f32 %v620, %v604
    %v623 = vmax.f32 %v621, %v606
    %v624 = vmax.f32 %v622, %v608
    %v625 = vmax.f32 %v623, %v610
    %v626 = vmax.f32 %v624, %v625
    %v627 = vmax.f32 %v581, %v585
    %v628 = vmax.f32 %v583, %v587
    %v629 = vmax.f32 %v627, %v589
    %v630 = vmax.f32 %v628, %v591
    %v631 = vmax.f32 %v629, %v593
    %v632 = vmax.f32 %v630, %v595
    %v633 = vmax.f32 %v631, %v597
    %v634 = vmax.f32 %v632, %v599
    %v635 = vmax.f32 %v633, %v601
    %v636 = vmax.f32 %v634, %v603
    %v637 = vmax.f32 %v635, %v605
    %v638 = vmax.f32 %v636, %v607
    %v639 = vmax.f32 %v637, %v609
    %v640 = vmax.f32 %v638, %v611
    %v641 = vmax.f32 %v639, %v640
    %v642 = vsub.f32 %v324, %v626
    %v643 = vsub.f32 %v325, %v641
    %v644 = vsub.f32 %v326, %v626
    %v645 = vsub.f32 %v327, %v641
    %v646 = vsub.f32 %v328, %v626
    %v647 = vsub.f32 %v329, %v641
    %v648 = vsub.f32 %v330, %v626
    %v649 = vsub.f32 %v331, %v641
    %v650 = vsub.f32 %v332, %v626
    %v651 = vsub.f32 %v333, %v641
    %v652 = vsub.f32 %v334, %v626
    %v653 = vsub.f32 %v335, %v641
    %v654 = vsub.f32 %v336, %v626
    %v655 = vsub.f32 %v337, %v641
    %v656 = vsub.f32 %v338, %v626
    %v657 = vsub.f32 %v339, %v641
    %v658 = vsub.f32 %v340, %v626
    %v659 = vsub.f32 %v341, %v641
    %v660 = vsub.f32 %v342, %v626
    %v661 = vsub.f32 %v343, %v641
    %v662 = vsub.f32 %v344, %v626
    %v663 = vsub.f32 %v345, %v641
    %v664 = vsub.f32 %v346, %v626
    %v665 = vsub.f32 %v347, %v641
    %v666 = vsub.f32 %v348, %v626
    %v667 = vsub.f32 %v349, %v641
    %v668 = vsub.f32 %v350, %v626
    %v669 = vsub.f32 %v351, %v641
    %v670 = vsub.f32 %v352, %v626
    %v671 = vsub.f32 %v353, %v641
    %v672 = vsub.f32 %v354, %v626
    %v673 = vsub.f32 %v355, %v641
    %v674 = vmul.f32 %v642, 1.442695
    %v675 = vpow.pop %v674
    %v676 = vmul.f32 %v643, 1.442695
    %v677 = vpow.pop %v676
    %v678 = vmul.f32 %v644, 1.442695
    %v679 = vpow.pop %v678
    %v680 = vmul.f32 %v645, 1.442695
    %v681 = vpow.pop %v680
    %v682 = vmul.f32 %v646, 1.442695
    %v683 = vpow.pop %v682
    %v684 = vmul.f32 %v647, 1.442695
    %v685 = vpow.pop %v684
    %v686 = vmul.f32 %v648, 1.442695
    %v687 = vpow.pop %v686
    %v688 = vmul.f32 %v649, 1.442695
    %v689 = vpow.pop %v688
    %v690 = vmul.f32 %v650, 1.442695
    %v691 = vpow.pop %v690
    %v692 = vmul.f32 %v651, 1.442695
    %v693 = vpow.pop %v692
    %v694 = vmul.f32 %v652, 1.442695
    %v695 = vpow.pop %v694
    %v696 = vmul.f32 %v653, 1.442695
    %v697 = vpow.pop %v696
    %v698 = vmul.f32 %v654, 1.442695
    %v699 = vpow.pop %v698
    %v700 = vmul.f32 %v655, 1.442695
    %v701 = vpow.pop %v700
    %v702 = vmul.f32 %v656, 1.442695
    %v703 = vpow.pop %v702
    %v704 = vmul.f32 %v657, 1.442695
    %v705 = vpow.pop %v704
    %v706 = vmul.f32 %v658, 1.442695
    %v707 = vpow.pop %v706
    %v708 = vmul.f32 %v659, 1.442695
    %v709 = vpow.pop %v708
    %v710 = vmul.f32 %v660, 1.442695
    %v711 = vpow.pop %v710
    %v712 = vmul.f32 %v661, 1.442695
    %v713 = vpow.pop %v712
    %v714 = vmul.f32 %v662, 1.442695
    %v715 = vpow.pop %v714
    %v716 = vmul.f32 %v663, 1.442695
    %v717 = vpow.pop %v716
    %v718 = vmul.f32 %v664, 1.442695
    %v719 = vpow.pop %v718
    %v720 = vmul.f32 %v665, 1.442695
    %v721 = vpow.pop %v720
    %v722 = vmul.f32 %v666, 1.442695
    %v723 = vpow.pop %v722
    %v724 = vmul.f32 %v667, 1.442695
    %v725 = vpow.pop %v724
    %v726 = vmul.f32 %v668, 1.442695
    %v727 = vpow.pop %v726
    %v728 = vmul.f32 %v669, 1.442695
    %v729 = vpow.pop %v728
    %v730 = vmul.f32 %v670, 1.442695
    %v731 = vpow.pop %v730
    %v732 = vmul.f32 %v671, 1.442695
    %v733 = vpow.pop %v732
    %v734 = vmul.f32 %v672, 1.442695
    %v735 = vpow.pop %v734
    %v736 = vmul.f32 %v673, 1.442695
    %v737 = vpow.pop %v736
    %v738 = vsel %vm548, %v675, 0.0
    %v739 = vsel %vm549, %v677, 0.0
    %v740 = vsel %vm550, %v679, 0.0
    %v741 = vsel %vm551, %v681, 0.0
    %v742 = vsel %vm552, %v683, 0.0
    %v743 = vsel %vm553, %v685, 0.0
    %v744 = vsel %vm554, %v687, 0.0
    %v745 = vsel %vm555, %v689, 0.0
    %v746 = vsel %vm556, %v691, 0.0
    %v747 = vsel %vm557, %v693, 0.0
    %v748 = vsel %vm558, %v695, 0.0
    %v749 = vsel %vm559, %v697, 0.0
    %v750 = vsel %vm560, %v699, 0.0
    %v751 = vsel %vm561, %v701, 0.0
    %v752 = vsel %vm562, %v703, 0.0
    %v753 = vsel %vm563, %v705, 0.0
    %v754 = vsel %vm564, %v707, 0.0
    %v755 = vsel %vm565, %v709, 0.0
    %v756 = vsel %vm566, %v711, 0.0
    %v757 = vsel %vm567, %v713, 0.0
    %v758 = vsel %vm568, %v715, 0.0
    %v759 = vsel %vm569, %v717, 0.0
    %v760 = vsel %vm570, %v719, 0.0
    %v761 = vsel %vm571, %v721, 0.0
    %v762 = vsel %vm572, %v723, 0.0
    %v763 = vsel %vm573, %v725, 0.0
    %v764 = vsel %vm574, %v727, 0.0
    %v765 = vsel %vm575, %v729, 0.0
    %v766 = vsel %vm576, %v731, 0.0
    %v767 = vsel %vm577, %v733, 0.0
    %v768 = vsel %vm578, %v735, 0.0
    %v769 = vsel %vm579, %v737, 0.0
    %v770 = vadd.f32 %v738, %v740
    %v771 = vadd.f32 %v770, %v742
    %v772 = vadd.f32 %v771, %v744
    %v773 = vadd.f32 %v772, %v746
    %v774 = vadd.f32 %v773, %v748
    %v775 = vadd.f32 %v774, %v750
    %v776 = vadd.f32 %v775, %v752
    %v777 = vadd.f32 %v776, %v754
    %v778 = vadd.f32 %v777, %v756
    %v779 = vadd.f32 %v778, %v758
    %v780 = vadd.f32 %v779, %v760
    %v781 = vadd.f32 %v780, %v762
    %v782 = vadd.f32 %v781, %v764
    %v783 = vadd.f32 %v782, %v766
    %v784 = vadd.f32 %v783, %v768
    %v785 = vadd.f32 %v739, %v741
    %v786 = vadd.f32 %v785, %v743
    %v787 = vadd.f32 %v786, %v745
    %v788 = vadd.f32 %v787, %v747
    %v789 = vadd.f32 %v788, %v749
    %v790 = vadd.f32 %v789, %v751
    %v791 = vadd.f32 %v790, %v753
    %v792 = vadd.f32 %v791, %v755
    %v793 = vadd.f32 %v792, %v757
    %v794 = vadd.f32 %v793, %v759
    %v795 = vadd.f32 %v794, %v761
    %v796 = vadd.f32 %v795, %v763
    %v797 = vadd.f32 %v796, %v765
    %v798 = vadd.f32 %v797, %v767
    %v799 = vadd.f32 %v798, %v769
    %vm800 = vcmp.gt.f32.partialorder %v784, 0.0
    %vm801 = vcmp.gt.f32.partialorder %v799, 0.0
    %v802 = vsel %vm800, %v784, 1.0
    %v803 = vsel %vm801, %v799, 1.0
    %v804 = vrcp.pop %v802
    %v805 = vrcp.pop %v803
    %v806 = vmul.f32 %v802, %v804
    %v807 = vmul.f32 %v803, %v805
    %v808 = vsub.f32 2.0, %v806
    %v809 = vsub.f32 2.0, %v807
    %v810 = vmul.f32 %v804, %v808
    %v811 = vmul.f32 %v805, %v809
    %v812 = vmul.f32 %v738, %v810
    %v813 = vmul.f32 %v739, %v811
    %v814 = vmul.f32 %v740, %v810
    %v815 = vmul.f32 %v741, %v811
    %v816 = vmul.f32 %v742, %v810
    %v817 = vmul.f32 %v743, %v811
    %v818 = vmul.f32 %v744, %v810
    %v819 = vmul.f32 %v745, %v811
    %v820 = vmul.f32 %v746, %v810
    %v821 = vmul.f32 %v747, %v811
    %v822 = vmul.f32 %v748, %v810
    %v823 = vmul.f32 %v749, %v811
    %v824 = vmul.f32 %v750, %v810
    %v825 = vmul.f32 %v751, %v811
    %v826 = vmul.f32 %v752, %v810
    %v827 = vmul.f32 %v753, %v811
    %v828 = vmul.f32 %v754, %v810
    %v829 = vmul.f32 %v755, %v811
    %v830 = vmul.f32 %v756, %v810
    %v831 = vmul.f32 %v757, %v811
    %v832 = vmul.f32 %v758, %v810
    %v833 = vmul.f32 %v759, %v811
    %v834 = vmul.f32 %v760, %v810
    %v835 = vmul.f32 %v761, %v811
    %v836 = vmul.f32 %v762, %v810
    %v837 = vmul.f32 %v763, %v811
    %v838 = vmul.f32 %v764, %v810
    %v839 = vmul.f32 %v765, %v811
    %v840 = vmul.f32 %v766, %v810
    %v841 = vmul.f32 %v767, %v811
    %v842 = vmul.f32 %v768, %v810
    %v843 = vmul.f32 %v769, %v811
    %v844 = vsel %vm800, 1, 0
    %v845 = vsel %vm801, 1, 0
    %vm846 = vcmp.eq.s32.totalorder %v844, 1
    %vm847 = vcmp.eq.s32.totalorder %v845, 1
    %v848 = vsel %vm846, %v812, 0.0625
    %v849 = vsel %vm847, %v813, 0.0625
    %v850 = vsel %vm846, %v814, 0.0625
    %v851 = vsel %vm847, %v815, 0.0625
    %v852 = vsel %vm846, %v816, 0.0625
    %v853 = vsel %vm847, %v817, 0.0625
    %v854 = vsel %vm846, %v818, 0.0625
    %v855 = vsel %vm847, %v819, 0.0625
    %v856 = vsel %vm846, %v820, 0.0625
    %v857 = vsel %vm847, %v821, 0.0625
    %v858 = vsel %vm846, %v822, 0.0625
    %v859 = vsel %vm847, %v823, 0.0625
    %v860 = vsel %vm846, %v824, 0.0625
    %v861 = vsel %vm847, %v825, 0.0625
    %v862 = vsel %vm846, %v826, 0.0625
    %v863 = vsel %vm847, %v827, 0.0625
    %v864 = vsel %vm846, %v828, 0.0625
    %v865 = vsel %vm847, %v829, 0.0625
    %v866 = vsel %vm846, %v830, 0.0625
    %v867 = vsel %vm847, %v831, 0.0625
    %v868 = vsel %vm846, %v832, 0.0625
    %v869 = vsel %vm847, %v833, 0.0625
    %v870 = vsel %vm846, %v834, 0.0625
    %v871 = vsel %vm847, %v835, 0.0625
    %v872 = vsel %vm846, %v836, 0.0625
    %v873 = vsel %vm847, %v837, 0.0625
    %v874 = vsel %vm846, %v838, 0.0625
    %v875 = vsel %vm847, %v839, 0.0625
    %v876 = vsel %vm846, %v840, 0.0625
    %v877 = vsel %vm847, %v841, 0.0625
    %v878 = vsel %vm846, %v842, 0.0625
    %v879 = vsel %vm847, %v843, 0.0625
    %881 = vset.pattern.permute.xlu0 0
    %882 = vperm.xlu0 %881, %v356
    %v883 = vpop.permute.xlu0 %882
    %886 = vset.pattern.permute.xlu0 0
    %887 = vperm.xlu0 %886, %v357
    %v888 = vpop.permute.xlu0 %887
    %891 = vset.pattern.permute.xlu0 0
    %892 = vperm.xlu0 %891, %v358
    %v893 = vpop.permute.xlu0 %892
    %896 = vset.pattern.permute.xlu0 0
    %897 = vperm.xlu0 %896, %v359
    %v898 = vpop.permute.xlu0 %897
    %901 = vset.pattern.permute.xlu0 0
    %902 = vperm.xlu0 %901, %v360
    %v903 = vpop.permute.xlu0 %902
    %906 = vset.pattern.permute.xlu0 0
    %907 = vperm.xlu0 %906, %v361
    %v908 = vpop.permute.xlu0 %907
    %911 = vset.pattern.permute.xlu0 0
    %912 = vperm.xlu0 %911, %v362
    %v913 = vpop.permute.xlu0 %912
    %916 = vset.pattern.permute.xlu0 0
    %917 = vperm.xlu0 %916, %v363
    %v918 = vpop.permute.xlu0 %917
    %921 = vset.pattern.permute.xlu0 0
    %922 = vperm.xlu0 %921, %v364
    %v923 = vpop.permute.xlu0 %922
    %926 = vset.pattern.permute.xlu0 0
    %927 = vperm.xlu0 %926, %v365
    %v928 = vpop.permute.xlu0 %927
    %931 = vset.pattern.permute.xlu0 0
    %932 = vperm.xlu0 %931, %v366
    %v933 = vpop.permute.xlu0 %932
    %936 = vset.pattern.permute.xlu0 0
    %937 = vperm.xlu0 %936, %v367
    %v938 = vpop.permute.xlu0 %937
    %941 = vset.pattern.permute.xlu0 0
    %942 = vperm.xlu0 %941, %v368
    %v943 = vpop.permute.xlu0 %942
    %946 = vset.pattern.permute.xlu0 0
    %947 = vperm.xlu0 %946, %v369
    %v948 = vpop.permute.xlu0 %947
    %951 = vset.pattern.permute.xlu0 0
    %952 = vperm.xlu0 %951, %v370
    %v953 = vpop.permute.xlu0 %952
    %956 = vset.pattern.permute.xlu0 0
    %957 = vperm.xlu0 %956, %v371
    %v958 = vpop.permute.xlu0 %957
    %961 = vset.pattern.permute.xlu0 0
    %962 = vperm.xlu0 %961, %v372
    %v963 = vpop.permute.xlu0 %962
    %966 = vset.pattern.permute.xlu0 0
    %967 = vperm.xlu0 %966, %v373
    %v968 = vpop.permute.xlu0 %967
    %971 = vset.pattern.permute.xlu0 0
    %972 = vperm.xlu0 %971, %v374
    %v973 = vpop.permute.xlu0 %972
    %976 = vset.pattern.permute.xlu0 0
    %977 = vperm.xlu0 %976, %v375
    %v978 = vpop.permute.xlu0 %977
    %981 = vset.pattern.permute.xlu0 0
    %982 = vperm.xlu0 %981, %v376
    %v983 = vpop.permute.xlu0 %982
    %986 = vset.pattern.permute.xlu0 0
    %987 = vperm.xlu0 %986, %v377
    %v988 = vpop.permute.xlu0 %987
    %991 = vset.pattern.permute.xlu0 0
    %992 = vperm.xlu0 %991, %v378
    %v993 = vpop.permute.xlu0 %992
    %996 = vset.pattern.permute.xlu0 0
    %997 = vperm.xlu0 %996, %v379
    %v998 = vpop.permute.xlu0 %997
    %1001 = vset.pattern.permute.xlu0 0
    %1002 = vperm.xlu0 %1001, %v380
    %v1003 = vpop.permute.xlu0 %1002
    %1006 = vset.pattern.permute.xlu0 0
    %1007 = vperm.xlu0 %1006, %v381
    %v1008 = vpop.permute.xlu0 %1007
    %1011 = vset.pattern.permute.xlu0 0
    %1012 = vperm.xlu0 %1011, %v382
    %v1013 = vpop.permute.xlu0 %1012
    %1016 = vset.pattern.permute.xlu0 0
    %1017 = vperm.xlu0 %1016, %v383
    %v1018 = vpop.permute.xlu0 %1017
    %1021 = vset.pattern.permute.xlu0 0
    %1022 = vperm.xlu0 %1021, %v384
    %v1023 = vpop.permute.xlu0 %1022
    %1026 = vset.pattern.permute.xlu0 0
    %1027 = vperm.xlu0 %1026, %v385
    %v1028 = vpop.permute.xlu0 %1027
    %1031 = vset.pattern.permute.xlu0 0
    %1032 = vperm.xlu0 %1031, %v386
    %v1033 = vpop.permute.xlu0 %1032
    %1036 = vset.pattern.permute.xlu0 0
    %1037 = vperm.xlu0 %1036, %v387
    %v1038 = vpop.permute.xlu0 %1037
    %v1040 = vadd.f32 %v848, %v883
    %v1041 = vadd.f32 %v849, %v888
    %v1042 = vadd.f32 %v850, %v893
    %v1043 = vadd.f32 %v851, %v898
    %v1044 = vadd.f32 %v852, %v903
    %v1045 = vadd.f32 %v853, %v908
    %v1046 = vadd.f32 %v854, %v913
    %v1047 = vadd.f32 %v855, %v918
    %v1048 = vadd.f32 %v856, %v923
    %v1049 = vadd.f32 %v857, %v928
    %v1050 = vadd.f32 %v858, %v933
    %v1051 = vadd.f32 %v859, %v938
    %v1052 = vadd.f32 %v860, %v943
    %v1053 = vadd.f32 %v861, %v948
    %v1054 = vadd.f32 %v862, %v953
    %v1055 = vadd.f32 %v863, %v958
    %v1056 = vadd.f32 %v864, %v963
    %v1057 = vadd.f32 %v865, %v968
    %v1058 = vadd.f32 %v866, %v973
    %v1059 = vadd.f32 %v867, %v978
    %v1060 = vadd.f32 %v868, %v983
    %v1061 = vadd.f32 %v869, %v988
    %v1062 = vadd.f32 %v870, %v993
    %v1063 = vadd.f32 %v871, %v998
    %v1064 = vadd.f32 %v872, %v1003
    %v1065 = vadd.f32 %v873, %v1008
    %v1066 = vadd.f32 %v874, %v1013
    %v1067 = vadd.f32 %v875, %v1018
    %v1068 = vadd.f32 %v876, %v1023
    %v1069 = vadd.f32 %v877, %v1028
    %v1070 = vadd.f32 %v878, %v1033
    %v1071 = vadd.f32 %v879, %v1038
    %v1072 = vadd.f32 %v1040, %v1042
    %v1073 = vadd.f32 %v1072, %v1044
    %v1074 = vadd.f32 %v1073, %v1046
    %v1075 = vadd.f32 %v1074, %v1048
    %v1076 = vadd.f32 %v1075, %v1050
    %v1077 = vadd.f32 %v1076, %v1052
    %v1078 = vadd.f32 %v1077, %v1054
    %v1079 = vadd.f32 %v1078, %v1056
    %v1080 = vadd.f32 %v1079, %v1058
    %v1081 = vadd.f32 %v1080, %v1060
    %v1082 = vadd.f32 %v1081, %v1062
    %v1083 = vadd.f32 %v1082, %v1064
    %v1084 = vadd.f32 %v1083, %v1066
    %v1085 = vadd.f32 %v1084, %v1068
    %v1086 = vadd.f32 %v1085, %v1070
    %v1087 = vadd.f32 %v1041, %v1043
    %v1088 = vadd.f32 %v1087, %v1045
    %v1089 = vadd.f32 %v1088, %v1047
    %v1090 = vadd.f32 %v1089, %v1049
    %v1091 = vadd.f32 %v1090, %v1051
    %v1092 = vadd.f32 %v1091, %v1053
    %v1093 = vadd.f32 %v1092, %v1055
    %v1094 = vadd.f32 %v1093, %v1057
    %v1095 = vadd.f32 %v1094, %v1059
    %v1096 = vadd.f32 %v1095, %v1061
    %v1097 = vadd.f32 %v1096, %v1063
    %v1098 = vadd.f32 %v1097, %v1065
    %v1099 = vadd.f32 %v1098, %v1067
    %v1100 = vadd.f32 %v1099, %v1069
    %v1101 = vadd.f32 %v1100, %v1071
    %v1102 = vadd.f32 %v1086, %v1101
    %v1103 = vrot.slane %v1102, 4
    %v1104 = vadd.f32 %v1102, %v1103
    %v1105 = vrot.slane %v1104, 2
    %v1106 = vadd.f32 %v1104, %v1105
    %v1107 = vrot.slane %v1106, 1
    %v1108 = vadd.f32 %v1106, %v1107
    %v1109 = vmul.f32 %v1040, %v1040
    %v1110 = vmul.f32 %v1041, %v1041
    %v1111 = vmul.f32 %v1042, %v1042
    %v1112 = vmul.f32 %v1043, %v1043
    %v1113 = vmul.f32 %v1044, %v1044
    %v1114 = vmul.f32 %v1045, %v1045
    %v1115 = vmul.f32 %v1046, %v1046
    %v1116 = vmul.f32 %v1047, %v1047
    %v1117 = vmul.f32 %v1048, %v1048
    %v1118 = vmul.f32 %v1049, %v1049
    %v1119 = vmul.f32 %v1050, %v1050
    %v1120 = vmul.f32 %v1051, %v1051
    %v1121 = vmul.f32 %v1052, %v1052
    %v1122 = vmul.f32 %v1053, %v1053
    %v1123 = vmul.f32 %v1054, %v1054
    %v1124 = vmul.f32 %v1055, %v1055
    %v1125 = vmul.f32 %v1056, %v1056
    %v1126 = vmul.f32 %v1057, %v1057
    %v1127 = vmul.f32 %v1058, %v1058
    %v1128 = vmul.f32 %v1059, %v1059
    %v1129 = vmul.f32 %v1060, %v1060
    %v1130 = vmul.f32 %v1061, %v1061
    %v1131 = vmul.f32 %v1062, %v1062
    %v1132 = vmul.f32 %v1063, %v1063
    %v1133 = vmul.f32 %v1064, %v1064
    %v1134 = vmul.f32 %v1065, %v1065
    %v1135 = vmul.f32 %v1066, %v1066
    %v1136 = vmul.f32 %v1067, %v1067
    %v1137 = vmul.f32 %v1068, %v1068
    %v1138 = vmul.f32 %v1069, %v1069
    %v1139 = vmul.f32 %v1070, %v1070
    %v1140 = vmul.f32 %v1071, %v1071
    %v1141 = vadd.f32 %v1109, %v1111
    %v1142 = vadd.f32 %v1141, %v1113
    %v1143 = vadd.f32 %v1142, %v1115
    %v1144 = vadd.f32 %v1143, %v1117
    %v1145 = vadd.f32 %v1144, %v1119
    %v1146 = vadd.f32 %v1145, %v1121
    %v1147 = vadd.f32 %v1146, %v1123
    %v1148 = vadd.f32 %v1147, %v1125
    %v1149 = vadd.f32 %v1148, %v1127
    %v1150 = vadd.f32 %v1149, %v1129
    %v1151 = vadd.f32 %v1150, %v1131
    %v1152 = vadd.f32 %v1151, %v1133
    %v1153 = vadd.f32 %v1152, %v1135
    %v1154 = vadd.f32 %v1153, %v1137
    %v1155 = vadd.f32 %v1154, %v1139
    %v1156 = vadd.f32 %v1110, %v1112
    %v1157 = vadd.f32 %v1156, %v1114
    %v1158 = vadd.f32 %v1157, %v1116
    %v1159 = vadd.f32 %v1158, %v1118
    %v1160 = vadd.f32 %v1159, %v1120
    %v1161 = vadd.f32 %v1160, %v1122
    %v1162 = vadd.f32 %v1161, %v1124
    %v1163 = vadd.f32 %v1162, %v1126
    %v1164 = vadd.f32 %v1163, %v1128
    %v1165 = vadd.f32 %v1164, %v1130
    %v1166 = vadd.f32 %v1165, %v1132
    %v1167 = vadd.f32 %v1166, %v1134
    %v1168 = vadd.f32 %v1167, %v1136
    %v1169 = vadd.f32 %v1168, %v1138
    %v1170 = vadd.f32 %v1169, %v1140
    %v1171 = vadd.f32 %v1155, %v1170
    %v1172 = vrot.slane %v1171, 4
    %v1173 = vadd.f32 %v1171, %v1172
    %v1174 = vrot.slane %v1173, 2
    %v1175 = vadd.f32 %v1173, %v1174
    %v1176 = vrot.slane %v1175, 1
    %v1177 = vadd.f32 %v1175, %v1176
    %v1178 = vmul.f32 %v1108, 0.00390625
    %v1179 = vmul.f32 %v1177, 0.00390625
    %v1180 = vmul.f32 %v1178, %v1178
    %v1181 = vsub.f32 %v1179, %v1180
    %v1182 = vsub.f32 %v1040, %v1178
    %v1183 = vsub.f32 %v1041, %v1178
    %v1184 = vsub.f32 %v1042, %v1178
    %v1185 = vsub.f32 %v1043, %v1178
    %v1186 = vsub.f32 %v1044, %v1178
    %v1187 = vsub.f32 %v1045, %v1178
    %v1188 = vsub.f32 %v1046, %v1178
    %v1189 = vsub.f32 %v1047, %v1178
    %v1190 = vsub.f32 %v1048, %v1178
    %v1191 = vsub.f32 %v1049, %v1178
    %v1192 = vsub.f32 %v1050, %v1178
    %v1193 = vsub.f32 %v1051, %v1178
    %v1194 = vsub.f32 %v1052, %v1178
    %v1195 = vsub.f32 %v1053, %v1178
    %v1196 = vsub.f32 %v1054, %v1178
    %v1197 = vsub.f32 %v1055, %v1178
    %v1198 = vsub.f32 %v1056, %v1178
    %v1199 = vsub.f32 %v1057, %v1178
    %v1200 = vsub.f32 %v1058, %v1178
    %v1201 = vsub.f32 %v1059, %v1178
    %v1202 = vsub.f32 %v1060, %v1178
    %v1203 = vsub.f32 %v1061, %v1178
    %v1204 = vsub.f32 %v1062, %v1178
    %v1205 = vsub.f32 %v1063, %v1178
    %v1206 = vsub.f32 %v1064, %v1178
    %v1207 = vsub.f32 %v1065, %v1178
    %v1208 = vsub.f32 %v1066, %v1178
    %v1209 = vsub.f32 %v1067, %v1178
    %v1210 = vsub.f32 %v1068, %v1178
    %v1211 = vsub.f32 %v1069, %v1178
    %v1212 = vsub.f32 %v1070, %v1178
    %v1213 = vsub.f32 %v1071, %v1178
    %v1214 = vadd.f32 %v1181, 1e-05
    %v1215 = vrsqrt.pop %v1214
    %v1216 = vmul.f32 %v1215, %v1214
    %v1217 = vmul.f32 %v1216, %v1215
    %v1218 = vmul.f32 0.5, %v1217
    %v1219 = vsub.f32 1.5, %v1218
    %v1220 = vmul.f32 %v1215, %v1219
    %vm1221 = vweird.f32 %v1214
    %vm1222 = vweird.f32 %v1215
    %vm1223 = vmor %vm1221, %vm1222
    %v1224 = vsel %vm1223, %v1215, %v1220
    %v1225 = vmul.f32 %v1182, %v1224
    %v1226 = vmul.f32 %v1183, %v1224
    %v1227 = vmul.f32 %v1184, %v1224
    %v1228 = vmul.f32 %v1185, %v1224
    %v1229 = vmul.f32 %v1186, %v1224
    %v1230 = vmul.f32 %v1187, %v1224
    %v1231 = vmul.f32 %v1188, %v1224
    %v1232 = vmul.f32 %v1189, %v1224
    %v1233 = vmul.f32 %v1190, %v1224
    %v1234 = vmul.f32 %v1191, %v1224
    %v1235 = vmul.f32 %v1192, %v1224
    %v1236 = vmul.f32 %v1193, %v1224
    %v1237 = vmul.f32 %v1194, %v1224
    %v1238 = vmul.f32 %v1195, %v1224
    %v1239 = vmul.f32 %v1196, %v1224
    %v1240 = vmul.f32 %v1197, %v1224
    %v1241 = vmul.f32 %v1198, %v1224
    %v1242 = vmul.f32 %v1199, %v1224
    %v1243 = vmul.f32 %v1200, %v1224
    %v1244 = vmul.f32 %v1201, %v1224
    %v1245 = vmul.f32 %v1202, %v1224
    %v1246 = vmul.f32 %v1203, %v1224
    %v1247 = vmul.f32 %v1204, %v1224
    %v1248 = vmul.f32 %v1205, %v1224
    %v1249 = vmul.f32 %v1206, %v1224
    %v1250 = vmul.f32 %v1207, %v1224
    %v1251 = vmul.f32 %v1208, %v1224
    %v1252 = vmul.f32 %v1209, %v1224
    %v1253 = vmul.f32 %v1210, %v1224
    %v1254 = vmul.f32 %v1211, %v1224
    %v1255 = vmul.f32 %v1212, %v1224
    %v1256 = vmul.f32 %v1213, %v1224
    %v1257 = vld [vmem:[%s4] sm:$0xff]
    %v1258 = vld [vmem:[%s4 + $0x8] sm:$0xff]
    %v1259 = vld [vmem:[%s4 + $0x10] sm:$0xff]
    %v1260 = vld [vmem:[%s4 + $0x18] sm:$0xff]
    %v1261 = vld [vmem:[%s4 + $0x20] sm:$0xff]
    %v1262 = vld [vmem:[%s4 + $0x28] sm:$0xff]
    %v1263 = vld [vmem:[%s4 + $0x30] sm:$0xff]
    %v1264 = vld [vmem:[%s4 + $0x38] sm:$0xff]
    %v1265 = vld [vmem:[%s4 + $0x40] sm:$0xff]
    %v1266 = vld [vmem:[%s4 + $0x48] sm:$0xff]
    %v1267 = vld [vmem:[%s4 + $0x50] sm:$0xff]
    %v1268 = vld [vmem:[%s4 + $0x58] sm:$0xff]
    %v1269 = vld [vmem:[%s4 + $0x60] sm:$0xff]
    %v1270 = vld [vmem:[%s4 + $0x68] sm:$0xff]
    %v1271 = vld [vmem:[%s4 + $0x70] sm:$0xff]
    %v1272 = vld [vmem:[%s4 + $0x78] sm:$0xff]
    %v1273 = vld [vmem:[%s4 + $0x80] sm:$0xff]
    %v1274 = vld [vmem:[%s4 + $0x88] sm:$0xff]
    %v1275 = vld [vmem:[%s4 + $0x90] sm:$0xff]
    %v1276 = vld [vmem:[%s4 + $0x98] sm:$0xff]
    %v1277 = vld [vmem:[%s4 + $0xa0] sm:$0xff]
    %v1278 = vld [vmem:[%s4 + $0xa8] sm:$0xff]
    %v1279 = vld [vmem:[%s4 + $0xb0] sm:$0xff]
    %v1280 = vld [vmem:[%s4 + $0xb8] sm:$0xff]
    %v1281 = vld [vmem:[%s4 + $0xc0] sm:$0xff]
    %v1282 = vld [vmem:[%s4 + $0xc8] sm:$0xff]
    %v1283 = vld [vmem:[%s4 + $0xd0] sm:$0xff]
    %v1284 = vld [vmem:[%s4 + $0xd8] sm:$0xff]
    %v1285 = vld [vmem:[%s4 + $0xe0] sm:$0xff]
    %v1286 = vld [vmem:[%s4 + $0xe8] sm:$0xff]
    %v1287 = vld [vmem:[%s4 + $0xf0] sm:$0xff]
    %v1288 = vld [vmem:[%s4 + $0xf8] sm:$0xff]
    %1290 = vset.pattern.permute.xlu0 0
    %1291 = vperm.xlu0 %1290, %v1257
    %v1292 = vpop.permute.xlu0 %1291
    %1295 = vset.pattern.permute.xlu0 0
    %1296 = vperm.xlu0 %1295, %v1258
    %v1297 = vpop.permute.xlu0 %1296
    %1300 = vset.pattern.permute.xlu0 0
    %1301 = vperm.xlu0 %1300, %v1259
    %v1302 = vpop.permute.xlu0 %1301
    %1305 = vset.pattern.permute.xlu0 0
    %1306 = vperm.xlu0 %1305, %v1260
    %v1307 = vpop.permute.xlu0 %1306
    %1310 = vset.pattern.permute.xlu0 0
    %1311 = vperm.xlu0 %1310, %v1261
    %v1312 = vpop.permute.xlu0 %1311
    %1315 = vset.pattern.permute.xlu0 0
    %1316 = vperm.xlu0 %1315, %v1262
    %v1317 = vpop.permute.xlu0 %1316
    %1320 = vset.pattern.permute.xlu0 0
    %1321 = vperm.xlu0 %1320, %v1263
    %v1322 = vpop.permute.xlu0 %1321
    %1325 = vset.pattern.permute.xlu0 0
    %1326 = vperm.xlu0 %1325, %v1264
    %v1327 = vpop.permute.xlu0 %1326
    %1330 = vset.pattern.permute.xlu0 0
    %1331 = vperm.xlu0 %1330, %v1265
    %v1332 = vpop.permute.xlu0 %1331
    %1335 = vset.pattern.permute.xlu0 0
    %1336 = vperm.xlu0 %1335, %v1266
    %v1337 = vpop.permute.xlu0 %1336
    %1340 = vset.pattern.permute.xlu0 0
    %1341 = vperm.xlu0 %1340, %v1267
    %v1342 = vpop.permute.xlu0 %1341
    %1345 = vset.pattern.permute.xlu0 0
    %1346 = vperm.xlu0 %1345, %v1268
    %v1347 = vpop.permute.xlu0 %1346
    %1350 = vset.pattern.permute.xlu0 0
    %1351 = vperm.xlu0 %1350, %v1269
    %v1352 = vpop.permute.xlu0 %1351
    %1355 = vset.pattern.permute.xlu0 0
    %1356 = vperm.xlu0 %1355, %v1270
    %v1357 = vpop.permute.xlu0 %1356
    %1360 = vset.pattern.permute.xlu0 0
    %1361 = vperm.xlu0 %1360, %v1271
    %v1362 = vpop.permute.xlu0 %1361
    %1365 = vset.pattern.permute.xlu0 0
    %1366 = vperm.xlu0 %1365, %v1272
    %v1367 = vpop.permute.xlu0 %1366
    %1370 = vset.pattern.permute.xlu0 0
    %1371 = vperm.xlu0 %1370, %v1273
    %v1372 = vpop.permute.xlu0 %1371
    %1375 = vset.pattern.permute.xlu0 0
    %1376 = vperm.xlu0 %1375, %v1274
    %v1377 = vpop.permute.xlu0 %1376
    %1380 = vset.pattern.permute.xlu0 0
    %1381 = vperm.xlu0 %1380, %v1275
    %v1382 = vpop.permute.xlu0 %1381
    %1385 = vset.pattern.permute.xlu0 0
    %1386 = vperm.xlu0 %1385, %v1276
    %v1387 = vpop.permute.xlu0 %1386
    %1390 = vset.pattern.permute.xlu0 0
    %1391 = vperm.xlu0 %1390, %v1277
    %v1392 = vpop.permute.xlu0 %1391
    %1395 = vset.pattern.permute.xlu0 0
    %1396 = vperm.xlu0 %1395, %v1278
    %v1397 = vpop.permute.xlu0 %1396
    %1400 = vset.pattern.permute.xlu0 0
    %1401 = vperm.xlu0 %1400, %v1279
    %v1402 = vpop.permute.xlu0 %1401
    %1405 = vset.pattern.permute.xlu0 0
    %1406 = vperm.xlu0 %1405, %v1280
    %v1407 = vpop.permute.xlu0 %1406
    %1410 = vset.pattern.permute.xlu0 0
    %1411 = vperm.xlu0 %1410, %v1281
    %v1412 = vpop.permute.xlu0 %1411
    %1415 = vset.pattern.permute.xlu0 0
    %1416 = vperm.xlu0 %1415, %v1282
    %v1417 = vpop.permute.xlu0 %1416
    %1420 = vset.pattern.permute.xlu0 0
    %1421 = vperm.xlu0 %1420, %v1283
    %v1422 = vpop.permute.xlu0 %1421
    %1425 = vset.pattern.permute.xlu0 0
    %1426 = vperm.xlu0 %1425, %v1284
    %v1427 = vpop.permute.xlu0 %1426
    %1430 = vset.pattern.permute.xlu0 0
    %1431 = vperm.xlu0 %1430, %v1285
    %v1432 = vpop.permute.xlu0 %1431
    %1435 = vset.pattern.permute.xlu0 0
    %1436 = vperm.xlu0 %1435, %v1286
    %v1437 = vpop.permute.xlu0 %1436
    %1440 = vset.pattern.permute.xlu0 0
    %1441 = vperm.xlu0 %1440, %v1287
    %v1442 = vpop.permute.xlu0 %1441
    %1445 = vset.pattern.permute.xlu0 0
    %1446 = vperm.xlu0 %1445, %v1288
    %v1447 = vpop.permute.xlu0 %1446
    %v1449 = vmul.f32 %v1292, %v1225
    %v1450 = vmul.f32 %v1297, %v1226
    %v1451 = vmul.f32 %v1302, %v1227
    %v1452 = vmul.f32 %v1307, %v1228
    %v1453 = vmul.f32 %v1312, %v1229
    %v1454 = vmul.f32 %v1317, %v1230
    %v1455 = vmul.f32 %v1322, %v1231
    %v1456 = vmul.f32 %v1327, %v1232
    %v1457 = vmul.f32 %v1332, %v1233
    %v1458 = vmul.f32 %v1337, %v1234
    %v1459 = vmul.f32 %v1342, %v1235
    %v1460 = vmul.f32 %v1347, %v1236
    %v1461 = vmul.f32 %v1352, %v1237
    %v1462 = vmul.f32 %v1357, %v1238
    %v1463 = vmul.f32 %v1362, %v1239
    %v1464 = vmul.f32 %v1367, %v1240
    %v1465 = vmul.f32 %v1372, %v1241
    %v1466 = vmul.f32 %v1377, %v1242
    %v1467 = vmul.f32 %v1382, %v1243
    %v1468 = vmul.f32 %v1387, %v1244
    %v1469 = vmul.f32 %v1392, %v1245
    %v1470 = vmul.f32 %v1397, %v1246
    %v1471 = vmul.f32 %v1402, %v1247
    %v1472 = vmul.f32 %v1407, %v1248
    %v1473 = vmul.f32 %v1412, %v1249
    %v1474 = vmul.f32 %v1417, %v1250
    %v1475 = vmul.f32 %v1422, %v1251
    %v1476 = vmul.f32 %v1427, %v1252
    %v1477 = vmul.f32 %v1432, %v1253
    %v1478 = vmul.f32 %v1437, %v1254
    %v1479 = vmul.f32 %v1442, %v1255
    %v1480 = vmul.f32 %v1447, %v1256
    %v1481 = vld [vmem:[%s5] sm:$0xff]
    %v1482 = vld [vmem:[%s5 + $0x8] sm:$0xff]
    %v1483 = vld [vmem:[%s5 + $0x10] sm:$0xff]
    %v1484 = vld [vmem:[%s5 + $0x18] sm:$0xff]
    %v1485 = vld [vmem:[%s5 + $0x20] sm:$0xff]
    %v1486 = vld [vmem:[%s5 + $0x28] sm:$0xff]
    %v1487 = vld [vmem:[%s5 + $0x30] sm:$0xff]
    %v1488 = vld [vmem:[%s5 + $0x38] sm:$0xff]
    %v1489 = vld [vmem:[%s5 + $0x40] sm:$0xff]
    %v1490 = vld [vmem:[%s5 + $0x48] sm:$0xff]
    %v1491 = vld [vmem:[%s5 + $0x50] sm:$0xff]
    %v1492 = vld [vmem:[%s5 + $0x58] sm:$0xff]
    %v1493 = vld [vmem:[%s5 + $0x60] sm:$0xff]
    %v1494 = vld [vmem:[%s5 + $0x68] sm:$0xff]
    %v1495 = vld [vmem:[%s5 + $0x70] sm:$0xff]
    %v1496 = vld [vmem:[%s5 + $0x78] sm:$0xff]
    %v1497 = vld [vmem:[%s5 + $0x80] sm:$0xff]
    %v1498 = vld [vmem:[%s5 + $0x88] sm:$0xff]
    %v1499 = vld [vmem:[%s5 + $0x90] sm:$0xff]
    %v1500 = vld [vmem:[%s5 + $0x98] sm:$0xff]
    %v1501 = vld [vmem:[%s5 + $0xa0] sm:$0xff]
    %v1502 = vld [vmem:[%s5 + $0xa8] sm:$0xff]
    %v1503 = vld [vmem:[%s5 + $0xb0] sm:$0xff]
    %v1504 = vld [vmem:[%s5 + $0xb8] sm:$0xff]
    %v1505 = vld [vmem:[%s5 + $0xc0] sm:$0xff]
    %v1506 = vld [vmem:[%s5 + $0xc8] sm:$0xff]
    %v1507 = vld [vmem:[%s5 + $0xd0] sm:$0xff]
    %v1508 = vld [vmem:[%s5 + $0xd8] sm:$0xff]
    %v1509 = vld [vmem:[%s5 + $0xe0] sm:$0xff]
    %v1510 = vld [vmem:[%s5 + $0xe8] sm:$0xff]
    %v1511 = vld [vmem:[%s5 + $0xf0] sm:$0xff]
    %v1512 = vld [vmem:[%s5 + $0xf8] sm:$0xff]
    %1514 = vset.pattern.permute.xlu0 0
    %1515 = vperm.xlu0 %1514, %v1481
    %v1516 = vpop.permute.xlu0 %1515
    %1519 = vset.pattern.permute.xlu0 0
    %1520 = vperm.xlu0 %1519, %v1482
    %v1521 = vpop.permute.xlu0 %1520
    %1524 = vset.pattern.permute.xlu0 0
    %1525 = vperm.xlu0 %1524, %v1483
    %v1526 = vpop.permute.xlu0 %1525
    %1529 = vset.pattern.permute.xlu0 0
    %1530 = vperm.xlu0 %1529, %v1484
    %v1531 = vpop.permute.xlu0 %1530
    %1534 = vset.pattern.permute.xlu0 0
    %1535 = vperm.xlu0 %1534, %v1485
    %v1536 = vpop.permute.xlu0 %1535
    %1539 = vset.pattern.permute.xlu0 0
    %1540 = vperm.xlu0 %1539, %v1486
    %v1541 = vpop.permute.xlu0 %1540
    %1544 = vset.pattern.permute.xlu0 0
    %1545 = vperm.xlu0 %1544, %v1487
    %v1546 = vpop.permute.xlu0 %1545
    %1549 = vset.pattern.permute.xlu0 0
    %1550 = vperm.xlu0 %1549, %v1488
    %v1551 = vpop.permute.xlu0 %1550
    %1554 = vset.pattern.permute.xlu0 0
    %1555 = vperm.xlu0 %1554, %v1489
    %v1556 = vpop.permute.xlu0 %1555
    %1559 = vset.pattern.permute.xlu0 0
    %1560 = vperm.xlu0 %1559, %v1490
    %v1561 = vpop.permute.xlu0 %1560
    %1564 = vset.pattern.permute.xlu0 0
    %1565 = vperm.xlu0 %1564, %v1491
    %v1566 = vpop.permute.xlu0 %1565
    %1569 = vset.pattern.permute.xlu0 0
    %1570 = vperm.xlu0 %1569, %v1492
    %v1571 = vpop.permute.xlu0 %1570
    %1574 = vset.pattern.permute.xlu0 0
    %1575 = vperm.xlu0 %1574, %v1493
    %v1576 = vpop.permute.xlu0 %1575
    %1579 = vset.pattern.permute.xlu0 0
    %1580 = vperm.xlu0 %1579, %v1494
    %v1581 = vpop.permute.xlu0 %1580
    %1584 = vset.pattern.permute.xlu0 0
    %1585 = vperm.xlu0 %1584, %v1495
    %v1586 = vpop.permute.xlu0 %1585
    %1589 = vset.pattern.permute.xlu0 0
    %1590 = vperm.xlu0 %1589, %v1496
    %v1591 = vpop.permute.xlu0 %1590
    %1594 = vset.pattern.permute.xlu0 0
    %1595 = vperm.xlu0 %1594, %v1497
    %v1596 = vpop.permute.xlu0 %1595
    %1599 = vset.pattern.permute.xlu0 0
    %1600 = vperm.xlu0 %1599, %v1498
    %v1601 = vpop.permute.xlu0 %1600
    %1604 = vset.pattern.permute.xlu0 0
    %1605 = vperm.xlu0 %1604, %v1499
    %v1606 = vpop.permute.xlu0 %1605
    %1609 = vset.pattern.permute.xlu0 0
    %1610 = vperm.xlu0 %1609, %v1500
    %v1611 = vpop.permute.xlu0 %1610
    %1614 = vset.pattern.permute.xlu0 0
    %1615 = vperm.xlu0 %1614, %v1501
    %v1616 = vpop.permute.xlu0 %1615
    %1619 = vset.pattern.permute.xlu0 0
    %1620 = vperm.xlu0 %1619, %v1502
    %v1621 = vpop.permute.xlu0 %1620
    %1624 = vset.pattern.permute.xlu0 0
    %1625 = vperm.xlu0 %1624, %v1503
    %v1626 = vpop.permute.xlu0 %1625
    %1629 = vset.pattern.permute.xlu0 0
    %1630 = vperm.xlu0 %1629, %v1504
    %v1631 = vpop.permute.xlu0 %1630
    %1634 = vset.pattern.permute.xlu0 0
    %1635 = vperm.xlu0 %1634, %v1505
    %v1636 = vpop.permute.xlu0 %1635
    %1639 = vset.pattern.permute.xlu0 0
    %1640 = vperm.xlu0 %1639, %v1506
    %v1641 = vpop.permute.xlu0 %1640
    %1644 = vset.pattern.permute.xlu0 0
    %1645 = vperm.xlu0 %1644, %v1507
    %v1646 = vpop.permute.xlu0 %1645
    %1649 = vset.pattern.permute.xlu0 0
    %1650 = vperm.xlu0 %1649, %v1508
    %v1651 = vpop.permute.xlu0 %1650
    %1654 = vset.pattern.permute.xlu0 0
    %1655 = vperm.xlu0 %1654, %v1509
    %v1656 = vpop.permute.xlu0 %1655
    %1659 = vset.pattern.permute.xlu0 0
    %1660 = vperm.xlu0 %1659, %v1510
    %v1661 = vpop.permute.xlu0 %1660
    %1664 = vset.pattern.permute.xlu0 0
    %1665 = vperm.xlu0 %1664, %v1511
    %v1666 = vpop.permute.xlu0 %1665
    %1669 = vset.pattern.permute.xlu0 0
    %1670 = vperm.xlu0 %1669, %v1512
    %v1671 = vpop.permute.xlu0 %1670
    %v1673 = vadd.f32 %v1449, %v1516
    %v1674 = vadd.f32 %v1450, %v1521
    %v1675 = vadd.f32 %v1451, %v1526
    %v1676 = vadd.f32 %v1452, %v1531
    %v1677 = vadd.f32 %v1453, %v1536
    %v1678 = vadd.f32 %v1454, %v1541
    %v1679 = vadd.f32 %v1455, %v1546
    %v1680 = vadd.f32 %v1456, %v1551
    %v1681 = vadd.f32 %v1457, %v1556
    %v1682 = vadd.f32 %v1458, %v1561
    %v1683 = vadd.f32 %v1459, %v1566
    %v1684 = vadd.f32 %v1460, %v1571
    %v1685 = vadd.f32 %v1461, %v1576
    %v1686 = vadd.f32 %v1462, %v1581
    %v1687 = vadd.f32 %v1463, %v1586
    %v1688 = vadd.f32 %v1464, %v1591
    %v1689 = vadd.f32 %v1465, %v1596
    %v1690 = vadd.f32 %v1466, %v1601
    %v1691 = vadd.f32 %v1467, %v1606
    %v1692 = vadd.f32 %v1468, %v1611
    %v1693 = vadd.f32 %v1469, %v1616
    %v1694 = vadd.f32 %v1470, %v1621
    %v1695 = vadd.f32 %v1471, %v1626
    %v1696 = vadd.f32 %v1472, %v1631
    %v1697 = vadd.f32 %v1473, %v1636
    %v1698 = vadd.f32 %v1474, %v1641
    %v1699 = vadd.f32 %v1475, %v1646
    %v1700 = vadd.f32 %v1476, %v1651
    %v1701 = vadd.f32 %v1477, %v1656
    %v1702 = vadd.f32 %v1478, %v1661
    %v1703 = vadd.f32 %v1479, %v1666
    %v1704 = vadd.f32 %v1480, %v1671
    %1705 = vst [vmem:[#allocation2] sm:$0xff] %v1673
    %1706 = vst [vmem:[#allocation2 + $0x8] sm:$0xff] %v1674
    %1707 = vst [vmem:[#allocation2 + $0x10] sm:$0xff] %v1675
    %1708 = vst [vmem:[#allocation2 + $0x18] sm:$0xff] %v1676
    %1709 = vst [vmem:[#allocation2 + $0x20] sm:$0xff] %v1677
    %1710 = vst [vmem:[#allocation2 + $0x28] sm:$0xff] %v1678
    %1711 = vst [vmem:[#allocation2 + $0x30] sm:$0xff] %v1679
    %1712 = vst [vmem:[#allocation2 + $0x38] sm:$0xff] %v1680
    %1713 = vst [vmem:[#allocation2 + $0x40] sm:$0xff] %v1681
    %1714 = vst [vmem:[#allocation2 + $0x48] sm:$0xff] %v1682
    %1715 = vst [vmem:[#allocation2 + $0x50] sm:$0xff] %v1683
    %1716 = vst [vmem:[#allocation2 + $0x58] sm:$0xff] %v1684
    %1717 = vst [vmem:[#allocation2 + $0x60] sm:$0xff] %v1685
    %1718 = vst [vmem:[#allocation2 + $0x68] sm:$0xff] %v1686
    %1719 = vst [vmem:[#allocation2 + $0x70] sm:$0xff] %v1687
    %1720 = vst [vmem:[#allocation2 + $0x78] sm:$0xff] %v1688
    %1721 = vst [vmem:[#allocation2 + $0x80] sm:$0xff] %v1689
    %1722 = vst [vmem:[#allocation2 + $0x88] sm:$0xff] %v1690
    %1723 = vst [vmem:[#allocation2 + $0x90] sm:$0xff] %v1691
    %1724 = vst [vmem:[#allocation2 + $0x98] sm:$0xff] %v1692
    %1725 = vst [vmem:[#allocation2 + $0xa0] sm:$0xff] %v1693
    %1726 = vst [vmem:[#allocation2 + $0xa8] sm:$0xff] %v1694
    %1727 = vst [vmem:[#allocation2 + $0xb0] sm:$0xff] %v1695
    %1728 = vst [vmem:[#allocation2 + $0xb8] sm:$0xff] %v1696
    %1729 = vst [vmem:[#allocation2 + $0xc0] sm:$0xff] %v1697
    %1730 = vst [vmem:[#allocation2 + $0xc8] sm:$0xff] %v1698
    %1731 = vst [vmem:[#allocation2 + $0xd0] sm:$0xff] %v1699
    %1732 = vst [vmem:[#allocation2 + $0xd8] sm:$0xff] %v1700
    %1733 = vst [vmem:[#allocation2 + $0xe0] sm:$0xff] %v1701
    %1734 = vst [vmem:[#allocation2 + $0xe8] sm:$0xff] %v1702
    %1735 = vst [vmem:[#allocation2 + $0xf0] sm:$0xff] %v1703
    %1736 = vst [vmem:[#allocation2 + $0xf8] sm:$0xff] %v1704
    // Predicated region
    $region26: #{tpu_custom_call.1} parent=1 // pred_check
      _
    $region27: #{tpu_custom_call.1} parent=1 // pred_check_branch
      %1738 = sbr.rel (0) target = $region29
    $region28: #{tpu_custom_call.1} parent=1 // pred_region
      %1740 = vsyncadd [#allocation3], 0
      %s1741 = sshll.u32 [#allocation2], 4
      %s1742 = int_to_ptr.vmem [resolvable:$true] %s1741
      %s1743 = sshll.u32 %s6, 4
      %s1744 = int_to_ptr.hbm [resolvable:$true] %s1743
      %1749 = dma.vmem_to_hbm [thread:$0]  %s1742, 4096, %s1744, [#allocation3], 128, 128, 8
    $region29: #{tpu_custom_call.1} parent=1 // pred_fallthru
      _
    // Predicated region
    $region30: #{tpu_custom_call.1} parent=1 // pred_check
      _
    $region31: #{tpu_custom_call.1} parent=1 // pred_check_branch
      %1751 = sbr.rel (0) target = $region33
    $region32: #{tpu_custom_call.1} parent=1 // pred_region
      %1753 = dma.done [#allocation3], 4096
    $region33: #{tpu_custom_call.1} parent=1 // pred_fallthru
      _
    %1754 = vsyncpa [#allocation3], 1

</llo_original>
